<compile_context>
chip_gen: v7x
topology: tpu7x:2x2x1
jax: 0.10.0
libtpu: 0.0.40
codegen_flags: <defaults>
</compile_context>

<pallas_src>
import functools
import math

import jax
import jax.numpy as jnp
from jax import lax
from jax.experimental import pallas as pl
from jax.experimental.pallas import tpu as pltpu


def _round_up(a, b):
    return (a + b - 1) // b * b


def _vmem_capacity_bytes():
    """Physical per-core VMEM; falls back to the smallest generation (v7x)."""
    try:
        return int(pltpu.get_tpu_info().vmem_capacity_bytes)
    except Exception:
        return 64 << 20


def _make_kernel(nd, dim_z, h3_dtype):
    """Kernel for `nd` D_in tiles, bottleneck width dim_z, decoder-hidden dtype."""

    def kernel(x_ref, w1_ref, b1_ref, w2_ref, b2_ref, w3_ref, b3_ref,
               w4_ref, b4_ref,
               xrecon_ref, ml_ref,
               sq_acc, h1_acc, h3_acc):
        d = pl.program_id(1)

        # ---- encoder phase (d in [0, nd)): accumulate x @ W1 and ||x||^2 ----
        @pl.when(d == 0)
        def _():
            sq_acc[...] = jnp.zeros_like(sq_acc)
            h1_acc[...] = jnp.zeros_like(h1_acc)

        @pl.when(d < nd)
        def _():
            x = x_ref[...]
            xf = x.astype(jnp.float32)
            sq_acc[...] += jnp.sum(xf * xf, axis=-1, keepdims=True)
            h1_acc[...] += jnp.dot(x, w1_ref[...],
                                   preferred_element_type=jnp.float32)

        # ---- bottleneck (d == nd-1): finish encoder, fused mu|logvar, h3 ----
        @pl.when(d == nd - 1)
        def _():
            # F.normalize folded in: (x @ W1) * rsqrt(max(||x||^2, 1e-24))
            # preserves torch's max(||x||, 1e-12) clamp.
            inv_norm = lax.rsqrt(jnp.maximum(sq_acc[...], 1e-24))
            h1 = jnp.tanh(h1_acc[...] * inv_norm + b1_ref[...])
            ml = jnp.dot(h1.astype(w2_ref.dtype), w2_ref[...],
                         preferred_element_type=jnp.float32) + b2_ref[...]
            ml_ref[...] = ml                 # fused [mu | logvar], lane-dense
            mu = ml[:, :dim_z]               # eval-mode reparameterize: z = mu
            h3_acc[...] = jnp.tanh(
                jnp.dot(mu.astype(w3_ref.dtype), w3_ref[...],
                        preferred_element_type=jnp.float32) + b3_ref[...]
            ).astype(h3_dtype)               # cast once for all decode steps

        # ---- decoder phase (d in [nd, 2*nd)): one x_recon tile per step -----
        @pl.when(d >= nd)
        def _():
            b4_tile = b4_ref[d - nd]         # (1, td), resident bias slice
            xrecon_ref[...] = (
                jnp.dot(h3_acc[...], w4_ref[...],
                        preferred_element_type=jnp.float32)
                + b4_tile).astype(xrecon_ref.dtype)

    return kernel


@functools.partial(jax.jit, static_argnames=("block_b", "block_d"))
def mult_vae_forward(x, params, block_b=256, block_d=512):
    """MultiVAE forward pass (eval mode). Returns (x_recon, mu, logvar)."""
    w1, b1, w2, b2, w3, b3, w4, b4 = params
    B, D_in = x.shape
    H = w1.shape[1]
    Z = w2.shape[1] // 2
    wdt = w1.dtype
    stream_dt = w1.dtype          # stream x at the weight dtype (bf16 halves bytes)

    # ---- tiling: clamp batch tile for small B; 128-aligned D_in tile --------
    tb = min(_round_up(block_b, 8), _round_up(B, 8))
    b_pad = _round_up(B, tb)
    nb = b_pad // tb
    td = min(_round_up(block_d, 128), _round_up(D_in, 128))
    d_pad = _round_up(D_in, td)
    nd = d_pad // td

    # ---- padding (never fall back to a single full-D_in block) --------------
    # TODO(synk): for production item counts, pad the weights once at init time
    #             instead of per call to avoid the per-call pad copies.
    x_p = x
    if b_pad != B or d_pad != D_in:
        x_p = jnp.pad(x, ((0, b_pad - B), (0, d_pad - D_in)))
    x_p = x_p.astype(stream_dt)
    if d_pad != D_in:
        w1 = jnp.pad(w1, ((0, d_pad - D_in), (0, 0)))
        w4 = jnp.pad(w4, ((0, 0), (0, d_pad - D_in)))
        b4 = jnp.pad(b4, ((0, 0), (0, d_pad - D_in)))
    b4_r = b4.reshape(nd, 1, td)  # fully resident; indexed along dim 0 in-kernel

    kernel = _make_kernel(nd, Z, wdt)

    # Index maps: during the decode phase x / W1 keep their last block index
    # (no re-DMA); during the encode phase W4 / x_recon stay at block 0.
    def x_map(i, d):
        return (i, jnp.minimum(d, nd - 1))

    def w1_map(i, d):
        return (jnp.minimum(d, nd - 1), 0)

    def w4_map(i, d):
        return (0, jnp.maximum(d - nd, 0))

    def xrecon_map(i, d):
        return (i, jnp.maximum(d - nd, 0))

    def const2(i, d):
        return (0, 0)

    def const3(i, d):
        return (0, 0, 0)

    def ml_map(i, d):
        return (i, 0)

    in_specs = [
        pl.BlockSpec((tb, td), x_map),          # x (streamed over D_in)
        pl.BlockSpec((td, H), w1_map),          # W1 (streamed over D_in)
        pl.BlockSpec((1, H), const2),           # b1 (resident)
        pl.BlockSpec((H, 2 * Z), const2),       # W2 fused mu|logvar (resident)
        pl.BlockSpec((1, 2 * Z), const2),       # b2 (resident)
        pl.BlockSpec((Z, H), const2),           # W3 (resident)
        pl.BlockSpec((1, H), const2),           # b3 (resident)
        pl.BlockSpec((H, td), w4_map),          # W4 (streamed over D_in)
        pl.BlockSpec((nd, 1, td), const3),      # b4 (fully resident, all tiles)
    ]
    out_specs = (
        pl.BlockSpec((tb, td), xrecon_map),     # x_recon
        pl.BlockSpec((tb, 2 * Z), ml_map),      # fused [mu | logvar]
    )
    out_shape = (
        jax.ShapeDtypeStruct((b_pad, d_pad), jnp.float32),
        jax.ShapeDtypeStruct((b_pad, 2 * Z), jnp.float32),
    )
    scratch_shapes = [
        pltpu.VMEM((tb, 1), jnp.float32),   # running ||x||^2
        pltpu.VMEM((tb, H), jnp.float32),   # encoder accumulator (x @ W1)
        pltpu.VMEM((tb, H), wdt),           # decoder hidden h3, MXU dtype
    ]

    # ---- VMEM budget (double-buffered specs + scratch), capped per chip -----
    def nbytes(shape, dtype):
        return math.prod(shape) * jnp.dtype(dtype).itemsize

    pipelined = 2 * (
        nbytes((tb, td), stream_dt)             # x tile
        + nbytes((td, H), wdt)                  # W1 tile
        + nbytes((H, td), wdt)                  # W4 tile
        + nbytes((tb, td), jnp.float32)         # x_recon tile
        + nbytes((tb, 2 * Z), jnp.float32)      # mu|logvar tile
        + nbytes((H, 2 * Z), wdt)               # W2 (resident)
        + nbytes((Z, H), wdt)                   # W3 (resident)
        + 2 * nbytes((1, H), jnp.float32)       # b1, b3
        + nbytes((1, 2 * Z), jnp.float32)       # b2
        + nbytes((nd, 8, td), b4_r.dtype)       # b4 (resident, sublane-padded)
    )
    scratch = (nbytes((tb, 1), jnp.float32) + nbytes((tb, H), jnp.float32)
               + nbytes((tb, H), wdt))
    vmem_cap = _vmem_capacity_bytes()
    vmem_budget = min(int(1.25 * (pipelined + scratch)) + (4 << 20),
                      int(0.85 * vmem_cap))

    flops = 2 * b_pad * (d_pad * H + H * 2 * Z + Z * H + H * d_pad)
    bytes_accessed = int(
        nbytes((b_pad, d_pad), stream_dt)                 # x read
        + nbytes((b_pad, d_pad), jnp.float32)             # x_recon write
        + nbytes((b_pad, 2 * Z), jnp.float32)             # mu|logvar write
        + nb * (nbytes((d_pad, H), wdt) + nbytes((H, d_pad), wdt))  # W1/W4 re-reads
        + nbytes((H, 2 * Z), wdt) + nbytes((Z, H), wdt)
    )
    cost = pl.CostEstimate(flops=flops,
                           transcendentals=b_pad * (2 * H + 1),
                           bytes_accessed=bytes_accessed)

    x_recon, ml = pl.pallas_call(
        kernel,
        out_shape=out_shape,
        grid_spec=pltpu.PrefetchScalarGridSpec(
            num_scalar_prefetch=0,
            grid=(nb, 2 * nd),
            in_specs=in_specs,
            out_specs=out_specs,
            scratch_shapes=scratch_shapes,
        ),
        compiler_params=pltpu.CompilerParams(
            # NOTE: v7x megacore only splits the batch axis when nb >= 2;
            # choose block_b <= B/2 there for large batches.
            dimension_semantics=("parallel", "arbitrary"),
            vmem_limit_bytes=vmem_budget,
        ),
        cost_estimate=cost,
    )(x_p, w1, b1, w2, b2, w3, b3, w4, b4_r)

    x_recon = x_recon[:B, :D_in]
    mu = ml[:B, :Z]
    logvar = ml[:B, Z:]
    return x_recon, mu, logvar


def init_params(key, dim_input, dim_hidden, dim_bottleneck,
                weight_dtype=jnp.bfloat16):
    """Matches _init_weights(): xavier_normal_ weights, normal(0, 0.001) biases.
    Weights stored transposed as (in_features, out_features) and cast to
    `weight_dtype` (bf16 halves HBM traffic; kernel accumulates in f32).
    For production dims prefer H, 2*Z padded to multiples of 128."""
    def xavier(k, fan_in, fan_out):
        std = (2.0 / (fan_in + fan_out)) ** 0.5
        w = std * jax.random.normal(k, (fan_in, fan_out), dtype=jnp.float32)
        return w.astype(weight_dtype)

    def bias(k, n):
        return 0.001 * jax.random.normal(k, (1, n), dtype=jnp.float32)

    ks = jax.random.split(key, 8)
    w1 = xavier(ks[0], dim_input, dim_hidden)           # q_in_hid_layer
    b1 = bias(ks[1], dim_hidden)
    w2 = xavier(ks[2], dim_hidden, 2 * dim_bottleneck)  # q_hid_bn_layer (fused)
    b2 = bias(ks[3], 2 * dim_bottleneck)
    w3 = xavier(ks[4], dim_bottleneck, dim_hidden)      # p_bn_hid_layer
    b3 = bias(ks[5], dim_hidden)
    w4 = xavier(ks[6], dim_hidden, dim_input)           # p_hid_out_layer
    b4 = bias(ks[7], dim_input)
    return (w1, b1, w2, b2, w3, b3, w4, b4)


def reference_forward(x, params, dim_z):
    """Pure-JAX f32 reference for validation (eval-mode semantics)."""
    w1, b1, w2, b2, w3, b3, w4, b4 = params
    f32 = lambda a: a.astype(jnp.float32)
    hp = lax.Precision.HIGHEST
    sq = jnp.sum(x * x, axis=-1, keepdims=True)
    h = x / jnp.maximum(jnp.sqrt(sq), 1e-12)
    h1 = jnp.tanh(jnp.dot(h, f32(w1), precision=hp) + b1)
    ml = jnp.dot(h1, f32(w2), precision=hp) + b2
    mu, logvar = ml[:, :dim_z], ml[:, dim_z:]
    h3 = jnp.tanh(jnp.dot(mu, f32(w3), precision=hp) + b3)
    x_recon = jnp.dot(h3, f32(w4), precision=hp) + b4
    return x_recon, mu, logvar


if __name__ == "__main__":
    key = jax.random.PRNGKey(0)

    def run_case(B, D_in, H, Z, block_b, block_d, k):
        kx, kp = jax.random.split(k)
        # Non-negative interaction-like input (bag-of-items counts).
        x = jax.random.uniform(kx, (B, D_in), dtype=jnp.float32)
        params = init_params(kp, D_in, H, Z, weight_dtype=jnp.bfloat16)
        out = mult_vae_forward(x, params, block_b=block_b, block_d=block_d)
        jax.block_until_ready(out)
        x_recon, mu, logvar = out
        r_recon, r_mu, r_logvar = reference_forward(x, params, Z)
        assert x_recon.shape == (B, D_in)
        assert mu.shape == (B, Z) and logvar.shape == (B, Z)
        assert jnp.allclose(x_recon, r_recon, atol=2e-2, rtol=2e-2)
        assert jnp.allclose(mu, r_mu, atol=2e-2, rtol=2e-2)
        assert jnp.allclose(logvar, r_logvar, atol=2e-2, rtol=2e-2)

    k0, k1, k2 = jax.random.split(key, 3)
    # D_in-tiled accumulation path (nd=2); small batch clamps tb to 8 (nb=1).
    run_case(B=8, D_in=512, H=256, Z=128, block_b=256, block_d=256, k=k0)
    # Single D_in tile (nd=1).
    run_case(B=8, D_in=512, H=256, Z=128, block_b=256, block_d=512, k=k1)
    # Non-aligned D_in (500 -> padded to 512), multiple batch tiles (nb=3) with
    # padded batch rows (40 -> 48).
    run_case(B=40, D_in=500, H=256, Z=128, block_b=16, block_d=256, k=k2)

    print("KERNEL_OK")
</pallas_src>

<mosaic_0001>
module attributes {stable_mosaic.version = 11 : i64} {
  func.func @kernel(%arg0: i32, %arg1: i32, %arg2: memref<8x256xbf16, #tpu.memory_space<vmem>>, %arg3: memref<256x256xbf16, #tpu.memory_space<vmem>>, %arg4: memref<1x256xf32, #tpu.memory_space<vmem>>, %arg5: memref<256x256xbf16, #tpu.memory_space<vmem>>, %arg6: memref<1x256xf32, #tpu.memory_space<vmem>>, %arg7: memref<128x256xbf16, #tpu.memory_space<vmem>>, %arg8: memref<1x256xf32, #tpu.memory_space<vmem>>, %arg9: memref<256x256xbf16, #tpu.memory_space<vmem>>, %arg10: memref<2x1x256xf32, #tpu.memory_space<vmem>>, %arg11: memref<8x256xf32, #tpu.memory_space<vmem>>, %arg12: memref<8x256xf32, #tpu.memory_space<vmem>>, %arg13: memref<8x1xf32, #tpu.memory_space<vmem>>, %arg14: memref<8x256xf32, #tpu.memory_space<vmem>>, %arg15: memref<8x256xbf16, #tpu.memory_space<vmem>>) attributes {dimension_semantics = [#tpu.dimension_semantics<parallel>, #tpu.dimension_semantics<arbitrary>], iteration_bounds = array<i64: 1, 4>, scalar_prefetch = 0 : i64, scratch_operands = 3 : i64, tpu.core_type = #tpu.core_type<tc>, window_params = [{transform_indices = @transform_0, window_bounds = array<i64: 8, 256>}, {transform_indices = @transform_1, window_bounds = array<i64: 256, 256>}, {pipeline_mode = #tpu.pipeline_mode<synchronous>, transform_indices = @transform_2, window_bounds = array<i64: 1, 256>}, {pipeline_mode = #tpu.pipeline_mode<synchronous>, transform_indices = @transform_3, window_bounds = array<i64: 256, 256>}, {pipeline_mode = #tpu.pipeline_mode<synchronous>, transform_indices = @transform_4, window_bounds = array<i64: 1, 256>}, {pipeline_mode = #tpu.pipeline_mode<synchronous>, transform_indices = @transform_5, window_bounds = array<i64: 128, 256>}, {pipeline_mode = #tpu.pipeline_mode<synchronous>, transform_indices = @transform_6, window_bounds = array<i64: 1, 256>}, {transform_indices = @transform_7, window_bounds = array<i64: 256, 256>}, {pipeline_mode = #tpu.pipeline_mode<synchronous>, transform_indices = @transform_8, window_bounds = array<i64: 2, 1, 256>}, {transform_indices = @transform_9, window_bounds = array<i64: 8, 256>}, {transform_indices = @transform_10, window_bounds = array<i64: 8, 256>}]} {
    %c0_i32 = arith.constant 0 : i32
    %0 = arith.cmpi eq, %arg1, %c0_i32 : i32
    %1 = arith.extui %0 : i1 to i32
    %c0_i32_0 = arith.constant 0 : i32
    %2 = arith.cmpi ne, %1, %c0_i32_0 : i32
    scf.if %2 {
      %cst = arith.constant 0.000000e+00 : f32
      %12 = vector.broadcast %cst : f32 to vector<8x1xf32>
      %c0 = arith.constant 0 : index
      %c0_5 = arith.constant 0 : index
      %13 = vector.load %arg13[%c0, %c0_5] : memref<8x1xf32, #tpu.memory_space<vmem>>, vector<8x1xf32>
      tpu.vector_store %arg13[%c0, %c0_5], %12 {strides = array<i32>} : memref<8x1xf32, #tpu.memory_space<vmem>>, vector<8x1xf32>,
      %cst_6 = arith.constant 0.000000e+00 : f32
      %14 = vector.broadcast %cst_6 : f32 to vector<8x256xf32>
      %c0_7 = arith.constant 0 : index
      %c0_8 = arith.constant 0 : index
      %15 = vector.load %arg14[%c0_7, %c0_8] : memref<8x256xf32, #tpu.memory_space<vmem>>, vector<8x256xf32>
      tpu.vector_store %arg14[%c0_7, %c0_8], %14 {strides = array<i32>} : memref<8x256xf32, #tpu.memory_space<vmem>>, vector<8x256xf32>,
    } else {
    }
    %c2_i32 = arith.constant 2 : i32
    %3 = arith.cmpi slt, %arg1, %c2_i32 : i32
    %4 = arith.extui %3 : i1 to i32
    %c0_i32_1 = arith.constant 0 : i32
    %5 = arith.cmpi ne, %4, %c0_i32_1 : i32
    scf.if %5 {
      %c0 = arith.constant 0 : index
      %c0_5 = arith.constant 0 : index
      %12 = vector.load %arg2[%c0, %c0_5] : memref<8x256xbf16, #tpu.memory_space<vmem>>, vector<8x256xbf16>
      %13 = arith.extf %12 : vector<8x256xbf16> to vector<8x256xf32>
      %c0_6 = arith.constant 0 : index
      %c0_7 = arith.constant 0 : index
      %14 = vector.load %arg13[%c0_6, %c0_7] : memref<8x1xf32, #tpu.memory_space<vmem>>, vector<8x1xf32>
      %15 = arith.mulf %13, %13 : vector<8x256xf32>
      %cst = arith.constant dense<0.000000e+00> : vector<8xf32>
      %16 = vector.multi_reduction <add>, %15, %cst [1] : vector<8x256xf32> to vector<8xf32>
      %17 = vector.shape_cast %16 : vector<8xf32> to vector<8x1xf32>
      %18 = arith.addf %14, %17 : vector<8x1xf32>
      %c0_8 = arith.constant 0 : index
      %c0_9 = arith.constant 0 : index
      %19 = vector.load %arg13[%c0_8, %c0_9] : memref<8x1xf32, #tpu.memory_space<vmem>>, vector<8x1xf32>
      tpu.vector_store %arg13[%c0_8, %c0_9], %18 {strides = array<i32>} : memref<8x1xf32, #tpu.memory_space<vmem>>, vector<8x1xf32>,
      %c0_10 = arith.constant 0 : index
      %c0_11 = arith.constant 0 : index
      %20 = vector.load %arg14[%c0_10, %c0_11] : memref<8x256xf32, #tpu.memory_space<vmem>>, vector<8x256xf32>
      %c0_12 = arith.constant 0 : index
      %c0_13 = arith.constant 0 : index
      %21 = vector.load %arg3[%c0_12, %c0_13] : memref<256x256xbf16, #tpu.memory_space<vmem>>, vector<256x256xbf16>
      %cst_14 = arith.constant dense<0.000000e+00> : vector<8x256xf32>
      %22 = tpu.matmul %12, %21, %cst_14 {dimension_numbers = #tpu.dot_dimension_numbers<[1], [0], [0], [1], [0, 0, 1, 1], [], []>} : vector<8x256xbf16>, vector<256x256xbf16>, vector<8x256xf32> -> vector<8x256xf32>
      %23 = arith.addf %20, %22 : vector<8x256xf32>
      %c0_15 = arith.constant 0 : index
      %c0_16 = arith.constant 0 : index
      %24 = vector.load %arg14[%c0_15, %c0_16] : memref<8x256xf32, #tpu.memory_space<vmem>>, vector<8x256xf32>
      tpu.vector_store %arg14[%c0_15, %c0_16], %23 {strides = array<i32>} : memref<8x256xf32, #tpu.memory_space<vmem>>, vector<8x256xf32>,
    } else {
    }
    %c1_i32 = arith.constant 1 : i32
    %6 = arith.cmpi eq, %arg1, %c1_i32 : i32
    %7 = arith.extui %6 : i1 to i32
    %c0_i32_2 = arith.constant 0 : i32
    %8 = arith.cmpi ne, %7, %c0_i32_2 : i32
    scf.if %8 {
      %c0 = arith.constant 0 : index
      %c0_5 = arith.constant 0 : index
      %12 = vector.load %arg13[%c0, %c0_5] : memref<8x1xf32, #tpu.memory_space<vmem>>, vector<8x1xf32>
      %cst = arith.constant 1.000000e-24 : f32
      %13 = vector.broadcast %cst : f32 to vector<8x1xf32>
      %14 = arith.maximumf %12, %13 : vector<8x1xf32>
      %15 = math.rsqrt %14 : vector<8x1xf32>
      %c0_6 = arith.constant 0 : index
      %c0_7 = arith.constant 0 : index
      %16 = vector.load %arg14[%c0_6, %c0_7] : memref<8x256xf32, #tpu.memory_space<vmem>>, vector<8x256xf32>
      %17 = vector.broadcast %15 : vector<8x1xf32> to vector<8x256xf32>
      %18 = arith.mulf %16, %17 : vector<8x256xf32>
      %c0_8 = arith.constant 0 : index
      %c0_9 = arith.constant 0 : index
      %19 = vector.load %arg4[%c0_8, %c0_9] : memref<1x256xf32, #tpu.memory_space<vmem>>, vector<1x256xf32>
      %20 = vector.broadcast %19 : vector<1x256xf32> to vector<8x256xf32>
      %21 = arith.addf %18, %20 : vector<8x256xf32>
      %22 = math.tanh %21 : vector<8x256xf32>
      %23 = arith.truncf %22 : vector<8x256xf32> to vector<8x256xbf16>
      %c0_10 = arith.constant 0 : index
      %c0_11 = arith.constant 0 : index
      %24 = vector.load %arg5[%c0_10, %c0_11] : memref<256x256xbf16, #tpu.memory_space<vmem>>, vector<256x256xbf16>
      %cst_12 = arith.constant dense<0.000000e+00> : vector<8x256xf32>
      %25 = tpu.matmul %23, %24, %cst_12 {dimension_numbers = #tpu.dot_dimension_numbers<[1], [0], [0], [1], [0, 0, 1, 1], [], []>} : vector<8x256xbf16>, vector<256x256xbf16>, vector<8x256xf32> -> vector<8x256xf32>
      %c0_13 = arith.constant 0 : index
      %c0_14 = arith.constant 0 : index
      %26 = vector.load %arg6[%c0_13, %c0_14] : memref<1x256xf32, #tpu.memory_space<vmem>>, vector<1x256xf32>
      %27 = vector.broadcast %26 : vector<1x256xf32> to vector<8x256xf32>
      %28 = arith.addf %25, %27 : vector<8x256xf32>
      %c0_15 = arith.constant 0 : index
      %c0_16 = arith.constant 0 : index
      %29 = vector.load %arg12[%c0_15, %c0_16] : memref<8x256xf32, #tpu.memory_space<vmem>>, vector<8x256xf32>
      tpu.vector_store %arg12[%c0_15, %c0_16], %28 {strides = array<i32>} : memref<8x256xf32, #tpu.memory_space<vmem>>, vector<8x256xf32>,
      %30 = vector.extract_strided_slice %28 {offsets = [0, 0], sizes = [8, 128], strides = [1, 1]} : vector<8x256xf32> to vector<8x128xf32>
      %31 = arith.truncf %30 : vector<8x128xf32> to vector<8x128xbf16>
      %c0_17 = arith.constant 0 : index
      %c0_18 = arith.constant 0 : index
      %32 = vector.load %arg7[%c0_17, %c0_18] : memref<128x256xbf16, #tpu.memory_space<vmem>>, vector<128x256xbf16>
      %cst_19 = arith.constant dense<0.000000e+00> : vector<8x256xf32>
      %33 = tpu.matmul %31, %32, %cst_19 {dimension_numbers = #tpu.dot_dimension_numbers<[1], [0], [0], [1], [0, 0, 1, 1], [], []>} : vector<8x128xbf16>, vector<128x256xbf16>, vector<8x256xf32> -> vector<8x256xf32>
      %c0_20 = arith.constant 0 : index
      %c0_21 = arith.constant 0 : index
      %34 = vector.load %arg8[%c0_20, %c0_21] : memref<1x256xf32, #tpu.memory_space<vmem>>, vector<1x256xf32>
      %35 = vector.broadcast %34 : vector<1x256xf32> to vector<8x256xf32>
      %36 = arith.addf %33, %35 : vector<8x256xf32>
      %37 = math.tanh %36 : vector<8x256xf32>
      %38 = arith.truncf %37 : vector<8x256xf32> to vector<8x256xbf16>
      %c0_22 = arith.constant 0 : index
      %c0_23 = arith.constant 0 : index
      %39 = vector.load %arg15[%c0_22, %c0_23] : memref<8x256xbf16, #tpu.memory_space<vmem>>, vector<8x256xbf16>
      tpu.vector_store %arg15[%c0_22, %c0_23], %38 {strides = array<i32>} : memref<8x256xbf16, #tpu.memory_space<vmem>>, vector<8x256xbf16>,
    } else {
    }
    %c2_i32_3 = arith.constant 2 : i32
    %9 = arith.cmpi sge, %arg1, %c2_i32_3 : i32
    %10 = arith.extui %9 : i1 to i32
    %c0_i32_4 = arith.constant 0 : i32
    %11 = arith.cmpi ne, %10, %c0_i32_4 : i32
    scf.if %11 {
      %c2_i32_5 = arith.constant 2 : i32
      %12 = arith.subi %arg1, %c2_i32_5 : i32
      %13 = arith.index_cast %12 : i32 to index
      %c0 = arith.constant 0 : index
      %c0_6 = arith.constant 0 : index
      %14 = vector.load %arg10[%13, %c0, %c0_6] : memref<2x1x256xf32, #tpu.memory_space<vmem>>, vector<1x1x256xf32>
      %15 = vector.shape_cast %14 : vector<1x1x256xf32> to vector<1x256xf32>
      %c0_7 = arith.constant 0 : index
      %c0_8 = arith.constant 0 : index
      %16 = vector.load %arg15[%c0_7, %c0_8] : memref<8x256xbf16, #tpu.memory_space<vmem>>, vector<8x256xbf16>
      %c0_9 = arith.constant 0 : index
      %c0_10 = arith.constant 0 : index
      %17 = vector.load %arg9[%c0_9, %c0_10] : memref<256x256xbf16, #tpu.memory_space<vmem>>, vector<256x256xbf16>
      %cst = arith.constant dense<0.000000e+00> : vector<8x256xf32>
      %18 = tpu.matmul %16, %17, %cst {dimension_numbers = #tpu.dot_dimension_numbers<[1], [0], [0], [1], [0, 0, 1, 1], [], []>} : vector<8x256xbf16>, vector<256x256xbf16>, vector<8x256xf32> -> vector<8x256xf32>
      %19 = vector.broadcast %15 : vector<1x256xf32> to vector<8x256xf32>
      %20 = arith.addf %18, %19 : vector<8x256xf32>
      %c0_11 = arith.constant 0 : index
      %c0_12 = arith.constant 0 : index
      %21 = vector.load %arg11[%c0_11, %c0_12] : memref<8x256xf32, #tpu.memory_space<vmem>>, vector<8x256xf32>
      tpu.vector_store %arg11[%c0_11, %c0_12], %20 {strides = array<i32>} : memref<8x256xf32, #tpu.memory_space<vmem>>, vector<8x256xf32>,
    } else {
    }
    return
  }
  func.func @transform_0(%arg0: i32, %arg1: i32) -> (i32, i32) {
    %c1_i32 = arith.constant 1 : i32
    %0 = arith.minsi %arg1, %c1_i32 : i32
    %c0_i32 = arith.constant 0 : i32
    return %arg0, %0 : i32, i32
  }
  func.func @transform_1(%arg0: i32, %arg1: i32) -> (i32, i32) {
    %c1_i32 = arith.constant 1 : i32
    %0 = arith.minsi %arg1, %c1_i32 : i32
    %c0_i32 = arith.constant 0 : i32
    %c0_i32_0 = arith.constant 0 : i32
    return %0, %c0_i32 : i32, i32
  }
  func.func @transform_2(%arg0: i32, %arg1: i32) -> (i32, i32) {
    %c0_i32 = arith.constant 0 : i32
    %c0_i32_0 = arith.constant 0 : i32
    %c0_i32_1 = arith.constant 0 : i32
    return %c0_i32, %c0_i32_0 : i32, i32
  }
  func.func @transform_3(%arg0: i32, %arg1: i32) -> (i32, i32) {
    %c0_i32 = arith.constant 0 : i32
    %c0_i32_0 = arith.constant 0 : i32
    %c0_i32_1 = arith.constant 0 : i32
    return %c0_i32, %c0_i32_0 : i32, i32
  }
  func.func @transform_4(%arg0: i32, %arg1: i32) -> (i32, i32) {
    %c0_i32 = arith.constant 0 : i32
    %c0_i32_0 = arith.constant 0 : i32
    %c0_i32_1 = arith.constant 0 : i32
    return %c0_i32, %c0_i32_0 : i32, i32
  }
  func.func @transform_5(%arg0: i32, %arg1: i32) -> (i32, i32) {
    %c0_i32 = arith.constant 0 : i32
    %c0_i32_0 = arith.constant 0 : i32
    %c0_i32_1 = arith.constant 0 : i32
    return %c0_i32, %c0_i32_0 : i32, i32
  }
  func.func @transform_6(%arg0: i32, %arg1: i32) -> (i32, i32) {
    %c0_i32 = arith.constant 0 : i32
    %c0_i32_0 = arith.constant 0 : i32
    %c0_i32_1 = arith.constant 0 : i32
    return %c0_i32, %c0_i32_0 : i32, i32
  }
  func.func @transform_7(%arg0: i32, %arg1: i32) -> (i32, i32) {
    %c2_i32 = arith.constant 2 : i32
    %0 = arith.subi %arg1, %c2_i32 : i32
    %c0_i32 = arith.constant 0 : i32
    %1 = arith.maxsi %0, %c0_i32 : i32
    %c0_i32_0 = arith.constant 0 : i32
    %c0_i32_1 = arith.constant 0 : i32
    return %c0_i32_0, %1 : i32, i32
  }
  func.func @transform_8(%arg0: i32, %arg1: i32) -> (i32, i32, i32) {
    %c0_i32 = arith.constant 0 : i32
    %c0_i32_0 = arith.constant 0 : i32
    %c0_i32_1 = arith.constant 0 : i32
    %c0_i32_2 = arith.constant 0 : i32
    return %c0_i32, %c0_i32_0, %c0_i32_1 : i32, i32, i32
  }
  func.func @transform_9(%arg0: i32, %arg1: i32) -> (i32, i32) {
    %c2_i32 = arith.constant 2 : i32
    %0 = arith.subi %arg1, %c2_i32 : i32
    %c0_i32 = arith.constant 0 : i32
    %1 = arith.maxsi %0, %c0_i32 : i32
    %c0_i32_0 = arith.constant 0 : i32
    return %arg0, %1 : i32, i32
  }
  func.func @transform_10(%arg0: i32, %arg1: i32) -> (i32, i32) {
    %c0_i32 = arith.constant 0 : i32
    %c0_i32_0 = arith.constant 0 : i32
    return %arg0, %c0_i32 : i32, i32
  }
}

</mosaic_0001>

<llo_original>
// kernel: mult_vae_forward.1
$region0: #{mult_vae_forward.1}
  #allocation0 [shape = 'u32[]', space=smem, size = 0x4, offset = 0x4, fixed_abs, tag = 'smem constant byte address 0x4 - core index']
  #allocation1 [shape = 'u32[144,128]{1,0:T(1,128)}', space=vmem, size = 0x12000, scoped, tag = 'internal scratch']
  #allocation2 [shape = 'f32[8,1]{1,0:T(8,128)}', space=vmem, size = 0x1000, scoped, tag = 'scratch operand']
  #allocation3 [shape = 'f32[8,256]{1,0:T(8,128)}', space=vmem, size = 0x2000, scoped, tag = 'scratch operand']
  #allocation4 [shape = 'bf16[8,256]{1,0:T(8,128)(2,1)}', space=vmem, size = 0x1000, scoped, tag = 'scratch operand']
  %s0 = inlined_call_operand.vmem [shape: bf16[8,512], index: 0, kind: input, shape index: {}]
  %s1 = inlined_call_operand.hbm [shape: bf16[512,256], index: 1, kind: input, shape index: {}]
  %s2 = inlined_call_operand.vmem [shape: f32[1,256], index: 2, kind: input, shape index: {}]
  %s3 = inlined_call_operand.hbm [shape: bf16[256,256], index: 3, kind: input, shape index: {}]
  %s4 = inlined_call_operand.vmem [shape: f32[1,256], index: 4, kind: input, shape index: {}]
  %s5 = inlined_call_operand.hbm [shape: bf16[128,256], index: 5, kind: input, shape index: {}]
  %s6 = inlined_call_operand.vmem [shape: f32[1,256], index: 6, kind: input, shape index: {}]
  %s7 = inlined_call_operand.hbm [shape: bf16[256,512], index: 7, kind: input, shape index: {}]
  %s8 = inlined_call_operand.vmem [shape: f32[2,1,256], index: 8, kind: input, shape index: {}]
  %s9 = inlined_call_operand.hbm [shape: f32[8,512], index: 9, kind: output, shape index: {0}]
  %s10 = inlined_call_operand.vmem [shape: f32[8,256], index: 10, kind: output, shape index: {1}]
  %11 = xla_tuple %s9, %s10
  %s12 = sld [smem:[#allocation0]]
  $region109: #{mult_vae_forward.1} parent=0
    _
  %s14 = ssub.s32 1, %s12
  %s15 = scalar_select 0, %s14, %s12
  $region1: #{mult_vae_forward.1} parent=0
    #allocation5 [shape = 'u8[262144]{0}', space=vmem, size = 0x40000, scoped, tag = 'input window, operand 1']
    #allocation6 [shape = 's32[2]{0}', space=sflag, size = 0x8, scoped, tag = 'scoped memory for mult_vae_forward.1']
    #allocation7 [shape = 's32[2]{0}', space=sflag, size = 0x8, scoped, tag = 'scoped memory for mult_vae_forward.1']
    #allocation8 [shape = 'u8[131072]{0}', space=vmem, size = 0x20000, scoped, tag = 'input window, operand 3, single buffered']
    #allocation9 [shape = 's32[1]{0}', space=sflag, size = 0x4, scoped, tag = 'scoped memory for mult_vae_forward.1']
    #allocation10 [shape = 'u8[65536]{0}', space=vmem, size = 0x10000, scoped, tag = 'input window, operand 5, single buffered']
    #allocation11 [shape = 'u8[262144]{0}', space=vmem, size = 0x40000, scoped, tag = 'input window, operand 7']
    #allocation12 [shape = 's32[2]{0}', space=sflag, size = 0x8, scoped, tag = 'scoped memory for mult_vae_forward.1']
    #allocation13 [shape = 'u8[16384]{0}', space=vmem, size = 0x4000, scoped, tag = 'output window, operand 0']
    %16 = vsyncpa [#allocation6], 0
    %s17 = scalar_lea.sflag [#allocation6], 1
    %18 = vsyncpa %s17, 0
    %19 = vsyncpa [#allocation9], 0
    %20 = vsyncpa [#allocation12], 0
    %s21 = scalar_lea.sflag [#allocation12], 1
    %22 = vsyncpa %s21, 0
    %23 = vsyncpa [#allocation7], 0
    %s24 = scalar_lea.sflag [#allocation7], 1
    %25 = vsyncpa %s24, 0
    loop: start=0, step=1, limit=6
    $region2: #{mult_vae_forward.1} parent=1 // loop_pre_header
      _
    $region3: #{mult_vae_forward.1} parent=1 // loop_header
      %s27 = sphi 0, %s31
      %p28 = scmp.ge.s32.totalorder %s27, 6
      %s34 = sphi 0, %s46
      %s35 = sphi 0, %s42
      %s36 = sphi 0, %s34
      %s37 = sphi 0, %s35
      %s38 = sphi 0, %s36
      %s39 = sphi 0, %s37
      %s55 = sphi 0, %s57
      %s58 = sphi 0, %s55
      %s59 = sphi 0, %s58
      %s75 = sphi 0, %s59
      %s85 = sphi 0, %s87
      %s88 = sphi 0, %s85
      %s89 = sphi 0, %s88
      %s105 = sphi 0, %s89
      %s109 = sphi 0, %s109
      %s111 = sphi 0, %s109
      %s112 = sphi 0, %s111
      %s126 = sphi 0, %s112
      %s130 = sphi 0, %s130
      %s132 = sphi 0, %s130
      %s133 = sphi 0, %s132
      %s147 = sphi 0, %s133
      %s151 = sphi 0, %s151
      %s153 = sphi 0, %s151
      %s154 = sphi 0, %s153
      %s168 = sphi 0, %s154
      %s172 = sphi 0, %s172
      %s174 = sphi 0, %s172
      %s175 = sphi 0, %s174
      %s189 = sphi 0, %s175
      %s193 = sphi 0, %s193
      %s195 = sphi 0, %s193
      %s196 = sphi 0, %s195
      %s210 = sphi 0, %s196
      %s222 = sphi 0, %s224
      %s225 = sphi 0, %s222
      %s226 = sphi 0, %s225
      %s242 = sphi 0, %s226
      %s246 = sphi 0, %s246
      %s248 = sphi 0, %s246
      %s249 = sphi 0, %s248
      %s263 = sphi 0, %s249
      %s277 = sphi 0, %s279
      %s280 = sphi 0, %s277
      %s281 = sphi 0, %s280
      %s297 = sphi 0, %s281
      %s303 = sphi 0, %s305
      %s306 = sphi 0, %s303
      %s307 = sphi 0, %s306
      %s323 = sphi 0, %s307
    $region4: #{mult_vae_forward.1} parent=1 // loop_header_branch
      %30 = sbr.rel (%p28) target = $region8
    $region5: #{mult_vae_forward.1} parent=1 // loop_body
      %s32 = ssub.s32 %s27, 1
      %s33 = ssub.s32 %s27, 2
      %s40 = sadd.s32 1, %s35
      %p41 = scmp.ge.s32.totalorder %s40, 4
      %s42 = scalar_select %p41, 0, %s40
      %s43 = sadd.s32 1, %s34
      %s44 = scalar_select %p41, %s43, %s34
      %p45 = scmp.ge.s32.totalorder %s44, 1
      %s46 = scalar_select %p45, 0, %s44
      %p47 = scmp.lt.s32.totalorder %s35, 1
      %s48 = scalar_select %p47, %s35, 1
      %p49 = scmp.lt.s32.totalorder %s42, 1
      %s50 = scalar_select %p49, %s42, 1
      %s51 = ssub.s32 %s34, %s46
      %s52 = ssub.s32 %s48, %s50
      %s53 = sor.u32 %s51, %s52
      %p54 = scmp.eq.s32.totalorder %s53, 0
      %s56 = sadd.s32 %s55, 1
      %s57 = scalar_select %p54, %s55, %s56
      %p60 = pneg %p54
      %p61 = scmp.eq.s32.totalorder %s27, 3
      %p62 = por %p60, %p61
      %p63 = scmp.ne.s32.totalorder %s55, %s58
      %p64 = scmp.eq.s32.totalorder %s27, 0
      %p65 = por %p63, %p64
      %p66 = scmp.ne.s32.totalorder %s55, %s58
      %p67 = scmp.eq.s32.totalorder %s32, 3
      %p68 = por %p66, %p67
      %p69 = scmp.ne.s32.totalorder %s58, %s59
      %p70 = scmp.eq.s32.totalorder %s32, 0
      %p71 = por %p69, %p70
      %p72 = scmp.ne.s32.totalorder %s58, %s59
      %p73 = scmp.eq.s32.totalorder %s33, 3
      %p74 = por %p72, %p73
      %p76 = scmp.ne.s32.totalorder %s59, %s75
      %p77 = scmp.eq.s32.totalorder %s33, 0
      %p78 = por %p76, %p77
      %p79 = scmp.lt.s32.totalorder %s35, 1
      %s80 = scalar_select %p79, %s35, 1
      %p81 = scmp.lt.s32.totalorder %s42, 1
      %s82 = scalar_select %p81, %s42, 1
      %s83 = ssub.s32 %s80, %s82
      %p84 = scmp.eq.s32.totalorder %s83, 0
      %s86 = sadd.s32 %s85, 1
      %s87 = scalar_select %p84, %s85, %s86
      %p90 = pneg %p84
      %p91 = scmp.eq.s32.totalorder %s27, 3
      %p92 = por %p90, %p91
      %p93 = scmp.ne.s32.totalorder %s85, %s88
      %p94 = scmp.eq.s32.totalorder %s27, 0
      %p95 = por %p93, %p94
      %p96 = scmp.ne.s32.totalorder %s85, %s88
      %p97 = scmp.eq.s32.totalorder %s32, 3
      %p98 = por %p96, %p97
      %p99 = scmp.ne.s32.totalorder %s88, %s89
      %p100 = scmp.eq.s32.totalorder %s32, 0
      %p101 = por %p99, %p100
      %p102 = scmp.ne.s32.totalorder %s88, %s89
      %p103 = scmp.eq.s32.totalorder %s33, 3
      %p104 = por %p102, %p103
      %p106 = scmp.ne.s32.totalorder %s89, %s105
      %p107 = scmp.eq.s32.totalorder %s33, 0
      %p108 = por %p106, %p107
      %s110 = sadd.s32 %s109, 1
      %p113 = scmp.eq.s32.totalorder %s27, 3
      %p114 = scmp.ne.s32.totalorder %s109, %s111
      %p115 = scmp.eq.s32.totalorder %s27, 0
      %p116 = por %p114, %p115
      %p117 = scmp.ne.s32.totalorder %s109, %s111
      %p118 = scmp.eq.s32.totalorder %s32, 3
      %p119 = por %p117, %p118
      %p120 = scmp.ne.s32.totalorder %s111, %s112
      %p121 = scmp.eq.s32.totalorder %s32, 0
      %p122 = por %p120, %p121
      %p123 = scmp.ne.s32.totalorder %s111, %s112
      %p124 = scmp.eq.s32.totalorder %s33, 3
      %p125 = por %p123, %p124
      %p127 = scmp.ne.s32.totalorder %s112, %s126
      %p128 = scmp.eq.s32.totalorder %s33, 0
      %p129 = por %p127, %p128
      %s131 = sadd.s32 %s130, 1
      %p134 = scmp.eq.s32.totalorder %s27, 3
      %p135 = scmp.ne.s32.totalorder %s130, %s132
      %p136 = scmp.eq.s32.totalorder %s27, 0
      %p137 = por %p135, %p136
      %p138 = scmp.ne.s32.totalorder %s130, %s132
      %p139 = scmp.eq.s32.totalorder %s32, 3
      %p140 = por %p138, %p139
      %p141 = scmp.ne.s32.totalorder %s132, %s133
      %p142 = scmp.eq.s32.totalorder %s32, 0
      %p143 = por %p141, %p142
      %p144 = scmp.ne.s32.totalorder %s132, %s133
      %p145 = scmp.eq.s32.totalorder %s33, 3
      %p146 = por %p144, %p145
      %p148 = scmp.ne.s32.totalorder %s133, %s147
      %p149 = scmp.eq.s32.totalorder %s33, 0
      %p150 = por %p148, %p149
      %s152 = sadd.s32 %s151, 1
      %p155 = scmp.eq.s32.totalorder %s27, 3
      %p156 = scmp.ne.s32.totalorder %s151, %s153
      %p157 = scmp.eq.s32.totalorder %s27, 0
      %p158 = por %p156, %p157
      %p159 = scmp.ne.s32.totalorder %s151, %s153
      %p160 = scmp.eq.s32.totalorder %s32, 3
      %p161 = por %p159, %p160
      %p162 = scmp.ne.s32.totalorder %s153, %s154
      %p163 = scmp.eq.s32.totalorder %s32, 0
      %p164 = por %p162, %p163
      %p165 = scmp.ne.s32.totalorder %s153, %s154
      %p166 = scmp.eq.s32.totalorder %s33, 3
      %p167 = por %p165, %p166
      %p169 = scmp.ne.s32.totalorder %s154, %s168
      %p170 = scmp.eq.s32.totalorder %s33, 0
      %p171 = por %p169, %p170
      %s173 = sadd.s32 %s172, 1
      %p176 = scmp.eq.s32.totalorder %s27, 3
      %p177 = scmp.ne.s32.totalorder %s172, %s174
      %p178 = scmp.eq.s32.totalorder %s27, 0
      %p179 = por %p177, %p178
      %p180 = scmp.ne.s32.totalorder %s172, %s174
      %p181 = scmp.eq.s32.totalorder %s32, 3
      %p182 = por %p180, %p181
      %p183 = scmp.ne.s32.totalorder %s174, %s175
      %p184 = scmp.eq.s32.totalorder %s32, 0
      %p185 = por %p183, %p184
      %p186 = scmp.ne.s32.totalorder %s174, %s175
      %p187 = scmp.eq.s32.totalorder %s33, 3
      %p188 = por %p186, %p187
      %p190 = scmp.ne.s32.totalorder %s175, %s189
      %p191 = scmp.eq.s32.totalorder %s33, 0
      %p192 = por %p190, %p191
      %s194 = sadd.s32 %s193, 1
      %p197 = scmp.eq.s32.totalorder %s27, 3
      %p198 = scmp.ne.s32.totalorder %s193, %s195
      %p199 = scmp.eq.s32.totalorder %s27, 0
      %p200 = por %p198, %p199
      %p201 = scmp.ne.s32.totalorder %s193, %s195
      %p202 = scmp.eq.s32.totalorder %s32, 3
      %p203 = por %p201, %p202
      %p204 = scmp.ne.s32.totalorder %s195, %s196
      %p205 = scmp.eq.s32.totalorder %s32, 0
      %p206 = por %p204, %p205
      %p207 = scmp.ne.s32.totalorder %s195, %s196
      %p208 = scmp.eq.s32.totalorder %s33, 3
      %p209 = por %p207, %p208
      %p211 = scmp.ne.s32.totalorder %s196, %s210
      %p212 = scmp.eq.s32.totalorder %s33, 0
      %p213 = por %p211, %p212
      %s214 = ssub.s32 %s35, 2
      %p215 = scmp.gt.s32.totalorder %s214, 0
      %s216 = scalar_select %p215, %s214, 0
      %s217 = ssub.s32 %s42, 2
      %p218 = scmp.gt.s32.totalorder %s217, 0
      %s219 = scalar_select %p218, %s217, 0
      %s220 = ssub.s32 %s216, %s219
      %p221 = scmp.eq.s32.totalorder %s220, 0
      %s223 = sadd.s32 %s222, 1
      %s224 = scalar_select %p221, %s222, %s223
      %p227 = pneg %p221
      %p228 = scmp.eq.s32.totalorder %s27, 3
      %p229 = por %p227, %p228
      %p230 = scmp.ne.s32.totalorder %s222, %s225
      %p231 = scmp.eq.s32.totalorder %s27, 0
      %p232 = por %p230, %p231
      %p233 = scmp.ne.s32.totalorder %s222, %s225
      %p234 = scmp.eq.s32.totalorder %s32, 3
      %p235 = por %p233, %p234
      %p236 = scmp.ne.s32.totalorder %s225, %s226
      %p237 = scmp.eq.s32.totalorder %s32, 0
      %p238 = por %p236, %p237
      %p239 = scmp.ne.s32.totalorder %s225, %s226
      %p240 = scmp.eq.s32.totalorder %s33, 3
      %p241 = por %p239, %p240
      %p243 = scmp.ne.s32.totalorder %s226, %s242
      %p244 = scmp.eq.s32.totalorder %s33, 0
      %p245 = por %p243, %p244
      %s247 = sadd.s32 %s246, 1
      %p250 = scmp.eq.s32.totalorder %s27, 3
      %p251 = scmp.ne.s32.totalorder %s246, %s248
      %p252 = scmp.eq.s32.totalorder %s27, 0
      %p253 = por %p251, %p252
      %p254 = scmp.ne.s32.totalorder %s246, %s248
      %p255 = scmp.eq.s32.totalorder %s32, 3
      %p256 = por %p254, %p255
      %p257 = scmp.ne.s32.totalorder %s248, %s249
      %p258 = scmp.eq.s32.totalorder %s32, 0
      %p259 = por %p257, %p258
      %p260 = scmp.ne.s32.totalorder %s248, %s249
      %p261 = scmp.eq.s32.totalorder %s33, 3
      %p262 = por %p260, %p261
      %p264 = scmp.ne.s32.totalorder %s249, %s263
      %p265 = scmp.eq.s32.totalorder %s33, 0
      %p266 = por %p264, %p265
      %s267 = ssub.s32 %s35, 2
      %p268 = scmp.gt.s32.totalorder %s267, 0
      %s269 = scalar_select %p268, %s267, 0
      %s270 = ssub.s32 %s42, 2
      %p271 = scmp.gt.s32.totalorder %s270, 0
      %s272 = scalar_select %p271, %s270, 0
      %s273 = ssub.s32 %s34, %s46
      %s274 = ssub.s32 %s269, %s272
      %s275 = sor.u32 %s273, %s274
      %p276 = scmp.eq.s32.totalorder %s275, 0
      %s278 = sadd.s32 %s277, 1
      %s279 = scalar_select %p276, %s277, %s278
      %p282 = pneg %p276
      %p283 = scmp.eq.s32.totalorder %s27, 3
      %p284 = por %p282, %p283
      %p285 = scmp.ne.s32.totalorder %s277, %s280
      %p286 = scmp.eq.s32.totalorder %s27, 0
      %p287 = por %p285, %p286
      %p288 = scmp.ne.s32.totalorder %s277, %s280
      %p289 = scmp.eq.s32.totalorder %s32, 3
      %p290 = por %p288, %p289
      %p291 = scmp.ne.s32.totalorder %s280, %s281
      %p292 = scmp.eq.s32.totalorder %s32, 0
      %p293 = por %p291, %p292
      %p294 = scmp.ne.s32.totalorder %s280, %s281
      %p295 = scmp.eq.s32.totalorder %s33, 3
      %p296 = por %p294, %p295
      %p298 = scmp.ne.s32.totalorder %s281, %s297
      %p299 = scmp.eq.s32.totalorder %s33, 0
      %p300 = por %p298, %p299
      %s301 = ssub.s32 %s34, %s46
      %p302 = scmp.eq.s32.totalorder %s301, 0
      %s304 = sadd.s32 %s303, 1
      %s305 = scalar_select %p302, %s303, %s304
      %p308 = pneg %p302
      %p309 = scmp.eq.s32.totalorder %s27, 3
      %p310 = por %p308, %p309
      %p311 = scmp.ne.s32.totalorder %s303, %s306
      %p312 = scmp.eq.s32.totalorder %s27, 0
      %p313 = por %p311, %p312
      %p314 = scmp.ne.s32.totalorder %s303, %s306
      %p315 = scmp.eq.s32.totalorder %s32, 3
      %p316 = por %p314, %p315
      %p317 = scmp.ne.s32.totalorder %s306, %s307
      %p318 = scmp.eq.s32.totalorder %s32, 0
      %p319 = por %p317, %p318
      %p320 = scmp.ne.s32.totalorder %s306, %s307
      %p321 = scmp.eq.s32.totalorder %s33, 3
      %p322 = por %p320, %p321
      %p324 = scmp.ne.s32.totalorder %s307, %s323
      %p325 = scmp.eq.s32.totalorder %s33, 0
      %p326 = por %p324, %p325
      %p327 = scmp.le.s32.totalorder 1, %s27
      %p328 = scmp.lt.s32.totalorder %s27, 5
      %p329 = pnand %p327, %p328
      %p330 = pneg %p329
      // Predicated region
      $region9: #{mult_vae_forward.1} parent=5 // pred_check
        _
      $region10: #{mult_vae_forward.1} parent=5 // pred_check_branch
        %332 = sbr.rel (%p329) target = $region12
      $region11: #{mult_vae_forward.1} parent=5 // pred_region
        %s333 = ssub.s32 %s27, 1
        // Predicated region
        $region13: #{mult_vae_forward.1} parent=11 // pred_check
          %p334 = pneg %p122
        $region14: #{mult_vae_forward.1} parent=11 // pred_check_branch
          %336 = sbr.rel (%p334) target = $region16
        $region15: #{mult_vae_forward.1} parent=11 // pred_region
          _
        $region16: #{mult_vae_forward.1} parent=11 // pred_fallthru
          _
        // Predicated region
        $region17: #{mult_vae_forward.1} parent=11 // pred_check
          %p337 = pneg %p143
        $region18: #{mult_vae_forward.1} parent=11 // pred_check_branch
          %339 = sbr.rel (%p337) target = $region20
        $region19: #{mult_vae_forward.1} parent=11 // pred_region
          %s341 = ssub.s32 4096, 4096
          %342 = vsyncadd [#allocation9], %s341
          %s343 = sshll.u32 [#allocation8], 4
          %s344 = int_to_ptr.vmem [resolvable:$true] %s343
          %349 = dma.hbm_to_vmem [thread:$0]  %s3, 4096, %s344, [#allocation9], 128, 128, 8
        $region20: #{mult_vae_forward.1} parent=11 // pred_fallthru
          _
        // Predicated region
        $region21: #{mult_vae_forward.1} parent=11 // pred_check
          %p350 = pneg %p164
        $region22: #{mult_vae_forward.1} parent=11 // pred_check_branch
          %352 = sbr.rel (%p350) target = $region24
        $region23: #{mult_vae_forward.1} parent=11 // pred_region
          _
        $region24: #{mult_vae_forward.1} parent=11 // pred_fallthru
          _
        // Predicated region
        $region25: #{mult_vae_forward.1} parent=11 // pred_check
          %p353 = pneg %p185
        $region26: #{mult_vae_forward.1} parent=11 // pred_check_branch
          %355 = sbr.rel (%p353) target = $region28
        $region27: #{mult_vae_forward.1} parent=11 // pred_region
          %s357 = ssub.s32 2048, 2048
          %358 = vsyncadd [#allocation9], %s357
          %s359 = sshll.u32 [#allocation10], 4
          %s360 = int_to_ptr.vmem [resolvable:$true] %s359
          %365 = dma.hbm_to_vmem [thread:$0]  %s5, 2048, %s360, [#allocation9], 128, 128, 8
        $region28: #{mult_vae_forward.1} parent=11 // pred_fallthru
          _
        // Predicated region
        $region29: #{mult_vae_forward.1} parent=11 // pred_check
          %p366 = pneg %p206
        $region30: #{mult_vae_forward.1} parent=11 // pred_check_branch
          %368 = sbr.rel (%p366) target = $region32
        $region31: #{mult_vae_forward.1} parent=11 // pred_region
          _
        $region32: #{mult_vae_forward.1} parent=11 // pred_fallthru
          _
        // Predicated region
        $region33: #{mult_vae_forward.1} parent=11 // pred_check
          %p369 = pneg %p259
        $region34: #{mult_vae_forward.1} parent=11 // pred_check_branch
          %371 = sbr.rel (%p369) target = $region36
        $region35: #{mult_vae_forward.1} parent=11 // pred_region
          _
        $region36: #{mult_vae_forward.1} parent=11 // pred_fallthru
          _
      $region12: #{mult_vae_forward.1} parent=5 // pred_fallthru
        _
      %p372 = scmp.lt.s32.totalorder %s27, 4
      // Predicated region
      $region37: #{mult_vae_forward.1} parent=5 // pred_check
        %p373 = pneg %p372
      $region38: #{mult_vae_forward.1} parent=5 // pred_check_branch
        %375 = sbr.rel (%p373) target = $region40
      $region39: #{mult_vae_forward.1} parent=5 // pred_region
        // Predicated region
        $region41: #{mult_vae_forward.1} parent=39 // pred_check
          %p376 = pneg %p65
        $region42: #{mult_vae_forward.1} parent=39 // pred_check_branch
          %378 = sbr.rel (%p376) target = $region44
        $region43: #{mult_vae_forward.1} parent=39 // pred_region
          %p379 = scmp.lt.s32.totalorder %s35, 1
          %s380 = scalar_select %p379, %s35, 1
          %s381 = smul.u32 2, %s380
          %p382 = scmp.lt.s32.totalorder %s34, 0
          %s383 = scalar_select %p382, %s34, 0
          %p384 = scmp.lt.s32.totalorder %s381, 3
          %s385 = scalar_select %p384, %s381, 3
          %s386 = smul.addr %s383, 4
          %s387 = sadd.s32 %s385, %s386
          %s388 = smul.addr %s387, 4
          %s389 = scalar_lea.vmem %s0, %s388
          %p390 = scmp.lt.s32.totalorder %s35, 1
          %s391 = scalar_select %p390, %s35, 1
          %s392 = smul.u32 2, %s391
        $region44: #{mult_vae_forward.1} parent=39 // pred_fallthru
          _
        // Predicated region
        $region45: #{mult_vae_forward.1} parent=39 // pred_check
          %p393 = pneg %p95
        $region46: #{mult_vae_forward.1} parent=39 // pred_check_branch
          %395 = sbr.rel (%p393) target = $region48
        $region47: #{mult_vae_forward.1} parent=39 // pred_region
          %s396 = sand.u32 %s85, 1
          %s397 = scalar_lea.sflag [#allocation6], %s396
          %s398 = sand.u32 %s85, 1
          %s399 = smul.addr %s398, 256
          %s400 = scalar_lea.vmem [#allocation5], %s399
          %p401 = scmp.lt.s32.totalorder %s35, 1
          %s402 = scalar_select %p401, %s35, 1
          %s403 = smul.u32 32, %s402
          %s405 = ssub.s32 4096, 4096
          %406 = vsyncadd %s397, %s405
          %s407 = smul.addr %s403, 2
          %s408 = smul.addr %s407, 64
          %s409 = scalar_lea.hbm %s1, %s408
          %s410 = sshll.u32 %s400, 4
          %s411 = int_to_ptr.vmem [resolvable:$true] %s410
          %416 = dma.hbm_to_vmem [thread:$0]  %s409, 4096, %s411, %s397, 128, 128, 8
        $region48: #{mult_vae_forward.1} parent=39 // pred_fallthru
          _
        // Predicated region
        $region49: #{mult_vae_forward.1} parent=39 // pred_check
          %p417 = pneg %p232
        $region50: #{mult_vae_forward.1} parent=39 // pred_check_branch
          %419 = sbr.rel (%p417) target = $region52
        $region51: #{mult_vae_forward.1} parent=39 // pred_region
          %s420 = sand.u32 %s222, 1
          %s421 = scalar_lea.sflag [#allocation12], %s420
          %s422 = sand.u32 %s222, 1
          %s423 = smul.addr %s422, 256
          %s424 = scalar_lea.vmem [#allocation11], %s423
          %s425 = ssub.s32 %s35, 2
          %p426 = scmp.gt.s32.totalorder %s425, 0
          %s427 = scalar_select %p426, %s425, 0
          %s428 = smul.u32 2, %s427
          %s430 = ssub.s32 4096, 4096
          %431 = vsyncadd %s421, %s430
          %s432 = smul.addr %s428, 64
          %s433 = scalar_lea.hbm %s7, %s432
          %s434 = sshll.u32 %s424, 4
          %s435 = int_to_ptr.vmem [resolvable:$true] %s434
          %440 = dma.hbm_to_vmem [thread:$0]  %s433, 4096, %s435, %s421, 256, 128, 8
        $region52: #{mult_vae_forward.1} parent=39 // pred_fallthru
          _
      $region40: #{mult_vae_forward.1} parent=5 // pred_fallthru
        _
      %p441 = scmp.le.s32.totalorder 1, %s27
      %p442 = scmp.lt.s32.totalorder %s27, 5
      %p443 = pnand %p441, %p442
      %p444 = pneg %p443
      // Predicated region
      $region53: #{mult_vae_forward.1} parent=5 // pred_check
        _
      $region54: #{mult_vae_forward.1} parent=5 // pred_check_branch
        %446 = sbr.rel (%p443) target = $region56
      $region55: #{mult_vae_forward.1} parent=5 // pred_region
        %s447 = ssub.s32 %s27, 1
        %s448 = sand.u32 %s88, 1
        %s449 = scalar_lea.sflag [#allocation6], %s448
        %s450 = sand.u32 %s88, 1
        %s451 = smul.addr %s450, 256
        %s452 = scalar_lea.vmem [#allocation5], %s451
        // Predicated region
        $region57: #{mult_vae_forward.1} parent=55 // pred_check
          %p453 = pneg %p101
        $region58: #{mult_vae_forward.1} parent=55 // pred_check_branch
          %455 = sbr.rel (%p453) target = $region60
        $region59: #{mult_vae_forward.1} parent=55 // pred_region
          %456 = dma.done %s449, 4096
        $region60: #{mult_vae_forward.1} parent=55 // pred_fallthru
          _
        // Predicated region
        $region61: #{mult_vae_forward.1} parent=55 // pred_check
          %p457 = pneg %p143
        $region62: #{mult_vae_forward.1} parent=55 // pred_check_branch
          %459 = sbr.rel (%p457) target = $region64
        $region63: #{mult_vae_forward.1} parent=55 // pred_region
          %460 = dma.done [#allocation9], 4096
        $region64: #{mult_vae_forward.1} parent=55 // pred_fallthru
          _
        // Predicated region
        $region65: #{mult_vae_forward.1} parent=55 // pred_check
          %p461 = pneg %p185
        $region66: #{mult_vae_forward.1} parent=55 // pred_check_branch
          %463 = sbr.rel (%p461) target = $region68
        $region67: #{mult_vae_forward.1} parent=55 // pred_region
          %464 = dma.done [#allocation9], 2048
        $region68: #{mult_vae_forward.1} parent=55 // pred_fallthru
          _
        %s465 = sand.u32 %s225, 1
        %s466 = scalar_lea.sflag [#allocation12], %s465
        %s467 = sand.u32 %s225, 1
        %s468 = smul.addr %s467, 256
        %s469 = scalar_lea.vmem [#allocation11], %s468
        // Predicated region
        $region69: #{mult_vae_forward.1} parent=55 // pred_check
          %p470 = pneg %p238
        $region70: #{mult_vae_forward.1} parent=55 // pred_check_branch
          %472 = sbr.rel (%p470) target = $region72
        $region71: #{mult_vae_forward.1} parent=55 // pred_region
          %473 = dma.done %s466, 4096
        $region72: #{mult_vae_forward.1} parent=55 // pred_fallthru
          _
        %p474 = scmp.lt.s32.totalorder %s37, 1
        %s475 = scalar_select %p474, %s37, 1
        %s476 = smul.u32 2, %s475
        %p477 = scmp.lt.s32.totalorder %s36, 0
        %s478 = scalar_select %p477, %s36, 0
        %p479 = scmp.lt.s32.totalorder %s476, 3
        %s480 = scalar_select %p479, %s476, 3
        %s481 = smul.addr %s478, 4
        %s482 = sadd.s32 %s480, %s481
        %s483 = smul.addr %s482, 4
        %s484 = scalar_lea.vmem %s0, %s483
        %p485 = pneg %p71
        %p486 = pneg %p68
        %s487 = sand.u32 %s88, 1
        %s488 = scalar_lea.sflag [#allocation6], %s487
        %s489 = sand.u32 %s88, 1
        %s490 = smul.addr %s489, 256
        %s491 = scalar_lea.vmem [#allocation5], %s490
        %p492 = pneg %p101
        %p493 = pneg %p98
        %p494 = pneg %p122
        %p495 = pneg %p119
        %p496 = pneg %p143
        %p497 = pneg %p140
        %p498 = pneg %p164
        %p499 = pneg %p161
        %p500 = pneg %p185
        %p501 = pneg %p182
        %p502 = pneg %p206
        %p503 = pneg %p203
        %s504 = sand.u32 %s225, 1
        %s505 = scalar_lea.sflag [#allocation12], %s504
        %s506 = sand.u32 %s225, 1
        %s507 = smul.addr %s506, 256
        %s508 = scalar_lea.vmem [#allocation11], %s507
        %p509 = pneg %p238
        %p510 = pneg %p235
        %p511 = pneg %p259
        %p512 = pneg %p256
        %p513 = pneg %p293
        %p514 = pneg %p290
        %s515 = sand.u32 %s280, 1
        %s516 = scalar_lea.sflag [#allocation7], %s515
        %s517 = sand.u32 %s280, 1
        %s518 = smul.addr %s517, 16
        %s519 = scalar_lea.vmem [#allocation13], %s518
        %p520 = pneg %p319
        %p521 = pneg %p316
        %p522 = scmp.lt.s32.totalorder %s36, 0
        %s523 = scalar_select %p522, %s36, 0
        %s524 = smul.addr %s523, 2
        %s525 = smul.addr %s524, 8
        %s526 = scalar_lea.vmem %s10, %s525
        %p527 = scmp.lt.s32.totalorder %s37, 1
        %s528 = scalar_select %p527, %s37, 1
        %s529 = smul.u32 2, %s528
        %p530 = scmp.lt.s32.totalorder %s36, 0
        %s531 = scalar_select %p530, %s36, 0
        %p532 = scmp.lt.s32.totalorder %s529, 3
        %s533 = scalar_select %p532, %s529, 3
        %s534 = smul.addr %s531, 4
        %s535 = sadd.s32 %s533, %s534
        %s536 = smul.addr %s535, 4
        %s537 = scalar_lea.vmem %s0, %s536
        %p538 = scmp.lt.s32.totalorder %s37, 1
        %s539 = scalar_select %p538, %s37, 1
        %s540 = smul.u32 2, %s539
        %p541 = scmp.lt.s32.totalorder %s37, 1
        %s542 = scalar_select %p541, %s37, 1
        %s543 = smul.u32 32, %s542
        %s544 = ssub.s32 %s37, 2
        %p545 = scmp.gt.s32.totalorder %s544, 0
        %s546 = scalar_select %p545, %s544, 0
        %s547 = smul.u32 2, %s546
        %s548 = ssub.s32 %s37, 2
        %p549 = scmp.gt.s32.totalorder %s548, 0
        %s550 = scalar_select %p549, %s548, 0
        %s551 = smul.u32 2, %s550
        %p552 = scmp.lt.s32.totalorder %s36, 0
        %s553 = scalar_select %p552, %s36, 0
        %s554 = smul.addr %s553, 2
        %s555 = smul.addr %s554, 8
        %s556 = scalar_lea.vmem %s10, %s555
        %p558 = scmp.eq.s32.totalorder %s37, 0
        // Predicated region
        $region73: #{mult_vae_forward.1} parent=55 // pred_check
          %p559 = pneg %p558
        $region74: #{mult_vae_forward.1} parent=55 // pred_check_branch
          %561 = sbr.rel (%p559) target = $region76
        $region75: #{mult_vae_forward.1} parent=55 // pred_region
          %vm562 = vcmask 7168
          %563 = vst.msk [vmem:[#allocation2] sm:$0xff] %vm562, 0.0
          %564 = vst [vmem:[#allocation3] sm:$0xff] 0.0
          %565 = vst [vmem:[#allocation3 + $0x8] sm:$0xff] 0.0
        $region76: #{mult_vae_forward.1} parent=55 // pred_fallthru
          _
        %p566 = scmp.lt.s32.totalorder %s37, 2
        // Predicated region
        $region77: #{mult_vae_forward.1} parent=55 // pred_check
          %p567 = pneg %p566
        $region78: #{mult_vae_forward.1} parent=55 // pred_check_branch
          %569 = sbr.rel (%p567) target = $region80
        $region79: #{mult_vae_forward.1} parent=55 // pred_region
          %v570 = vld [vmem:[%s537] sm:$0xff]
          %v571 = vunpack.c.l.bf16 %v570
          %v572 = vunpack.c.h.bf16 %v570
          %v573 = vld [vmem:[#allocation2] sm:$0xff]
          %v574 = vmul.f32 %v571, %v571
          %v575 = vmul.f32 %v572, %v572
          %v576 = vadd.f32 %v574, %v575
          %577 = vadd.xlane.f32.xlu0 %v576
          %v578 = vpop.xlane.xlu0 %577
          %v579 = vadd.f32 %v573, %v578
          %vm580 = vcmask 7168
          %581 = vst.msk [vmem:[#allocation2] sm:$0xff] %vm580, %v579
          %v582 = vld [vmem:[#allocation3] sm:$0xff]
          %v583 = vld [vmem:[#allocation3 + $0x8] sm:$0xff]
          %v584 = vld [vmem:[%s452] sm:$0xff]
          %v585 = vld [vmem:[%s452 + $0x8] sm:$0xff]
          %v586 = vld [vmem:[%s452 + $0x10] sm:$0xff]
          %v587 = vld [vmem:[%s452 + $0x18] sm:$0xff]
          %v588 = vld [vmem:[%s452 + $0x20] sm:$0xff]
          %v589 = vld [vmem:[%s452 + $0x28] sm:$0xff]
          %v590 = vld [vmem:[%s452 + $0x30] sm:$0xff]
          %v591 = vld [vmem:[%s452 + $0x38] sm:$0xff]
          %v592 = vld [vmem:[%s452 + $0x40] sm:$0xff]
          %v593 = vld [vmem:[%s452 + $0x48] sm:$0xff]
          %v594 = vld [vmem:[%s452 + $0x50] sm:$0xff]
          %v595 = vld [vmem:[%s452 + $0x58] sm:$0xff]
          %v596 = vld [vmem:[%s452 + $0x60] sm:$0xff]
          %v597 = vld [vmem:[%s452 + $0x68] sm:$0xff]
          %v598 = vld [vmem:[%s452 + $0x70] sm:$0xff]
          %v599 = vld [vmem:[%s452 + $0x78] sm:$0xff]
          %v600 = vld [vmem:[%s452 + $0x80] sm:$0xff]
          %v601 = vld [vmem:[%s452 + $0x88] sm:$0xff]
          %v602 = vld [vmem:[%s452 + $0x90] sm:$0xff]
          %v603 = vld [vmem:[%s452 + $0x98] sm:$0xff]
          %v604 = vld [vmem:[%s452 + $0xa0] sm:$0xff]
          %v605 = vld [vmem:[%s452 + $0xa8] sm:$0xff]
          %v606 = vld [vmem:[%s452 + $0xb0] sm:$0xff]
          %v607 = vld [vmem:[%s452 + $0xb8] sm:$0xff]
          %v608 = vld [vmem:[%s452 + $0xc0] sm:$0xff]
          %v609 = vld [vmem:[%s452 + $0xc8] sm:$0xff]
          %v610 = vld [vmem:[%s452 + $0xd0] sm:$0xff]
          %v611 = vld [vmem:[%s452 + $0xd8] sm:$0xff]
          %v612 = vld [vmem:[%s452 + $0xe0] sm:$0xff]
          %v613 = vld [vmem:[%s452 + $0xe8] sm:$0xff]
          %v614 = vld [vmem:[%s452 + $0xf0] sm:$0xff]
          %v615 = vld [vmem:[%s452 + $0xf8] sm:$0xff]
          %v617 = vunpack.c.l.b16 %v570
          %v618 = vunpack.c.h.b16 %v570
          %v619 = vpack.c.b16 %v617, %v617
          %v620 = vpack.c.b16 %v618, %v618
          %v655 = vunpack.c.l.b16 %v584
          %v656 = vunpack.c.h.b16 %v584
          %v657 = vunpack.c.l.b16 %v585
          %v658 = vunpack.c.h.b16 %v585
          %v659 = vunpack.c.l.b16 %v586
          %v660 = vunpack.c.h.b16 %v586
          %v661 = vunpack.c.l.b16 %v587
          %v662 = vunpack.c.h.b16 %v587
          %v663 = vunpack.c.l.b16 %v588
          %v664 = vunpack.c.h.b16 %v588
          %v665 = vunpack.c.l.b16 %v589
          %v666 = vunpack.c.h.b16 %v589
          %v667 = vunpack.c.l.b16 %v590
          %v668 = vunpack.c.h.b16 %v590
          %v669 = vunpack.c.l.b16 %v591
          %v670 = vunpack.c.h.b16 %v591
          %v671 = vunpack.c.l.b16 %v592
          %v672 = vunpack.c.h.b16 %v592
          %v673 = vunpack.c.l.b16 %v593
          %v674 = vunpack.c.h.b16 %v593
          %v675 = vunpack.c.l.b16 %v594
          %v676 = vunpack.c.h.b16 %v594
          %v677 = vunpack.c.l.b16 %v595
          %v678 = vunpack.c.h.b16 %v595
          %v679 = vunpack.c.l.b16 %v596
          %v680 = vunpack.c.h.b16 %v596
          %v681 = vunpack.c.l.b16 %v597
          %v682 = vunpack.c.h.b16 %v597
          %v683 = vunpack.c.l.b16 %v598
          %v684 = vunpack.c.h.b16 %v598
          %v685 = vunpack.c.l.b16 %v599
          %v686 = vunpack.c.h.b16 %v599
          %v687 = vunpack.c.l.b16 %v600
          %v688 = vunpack.c.h.b16 %v600
          %v689 = vunpack.c.l.b16 %v601
          %v690 = vunpack.c.h.b16 %v601
          %v691 = vunpack.c.l.b16 %v602
          %v692 = vunpack.c.h.b16 %v602
          %v693 = vunpack.c.l.b16 %v603
          %v694 = vunpack.c.h.b16 %v603
          %v695 = vunpack.c.l.b16 %v604
          %v696 = vunpack.c.h.b16 %v604
          %v697 = vunpack.c.l.b16 %v605
          %v698 = vunpack.c.h.b16 %v605
          %v699 = vunpack.c.l.b16 %v606
          %v700 = vunpack.c.h.b16 %v606
          %v701 = vunpack.c.l.b16 %v607
          %v702 = vunpack.c.h.b16 %v607
          %v703 = vunpack.c.l.b16 %v608
          %v704 = vunpack.c.h.b16 %v608
          %v705 = vunpack.c.l.b16 %v609
          %v706 = vunpack.c.h.b16 %v609
          %v707 = vunpack.c.l.b16 %v610
          %v708 = vunpack.c.h.b16 %v610
          %v709 = vunpack.c.l.b16 %v611
          %v710 = vunpack.c.h.b16 %v611
          %v711 = vunpack.c.l.b16 %v612
          %v712 = vunpack.c.h.b16 %v612
          %v713 = vunpack.c.l.b16 %v613
          %v714 = vunpack.c.h.b16 %v613
          %v715 = vunpack.c.l.b16 %v614
          %v716 = vunpack.c.h.b16 %v614
          %v717 = vunpack.c.l.b16 %v615
          %v718 = vunpack.c.h.b16 %v615
          %v719 = vpack.c.b16 %v657, %v655
          %v720 = vpack.c.b16 %v658, %v656
          %v721 = vpack.c.b16 %v661, %v659
          %v722 = vpack.c.b16 %v662, %v660
          %v723 = vpack.c.b16 %v665, %v663
          %v724 = vpack.c.b16 %v666, %v664
          %v725 = vpack.c.b16 %v669, %v667
          %v726 = vpack.c.b16 %v670, %v668
          %v727 = vpack.c.b16 %v673, %v671
          %v728 = vpack.c.b16 %v674, %v672
          %v729 = vpack.c.b16 %v677, %v675
          %v730 = vpack.c.b16 %v678, %v676
          %v731 = vpack.c.b16 %v681, %v679
          %v732 = vpack.c.b16 %v682, %v680
          %v733 = vpack.c.b16 %v685, %v683
          %v734 = vpack.c.b16 %v686, %v684
          %v735 = vpack.c.b16 %v689, %v687
          %v736 = vpack.c.b16 %v690, %v688
          %v737 = vpack.c.b16 %v693, %v691
          %v738 = vpack.c.b16 %v694, %v692
          %v739 = vpack.c.b16 %v697, %v695
          %v740 = vpack.c.b16 %v698, %v696
          %v741 = vpack.c.b16 %v701, %v699
          %v742 = vpack.c.b16 %v702, %v700
          %v743 = vpack.c.b16 %v705, %v703
          %v744 = vpack.c.b16 %v706, %v704
          %v745 = vpack.c.b16 %v709, %v707
          %v746 = vpack.c.b16 %v710, %v708
          %v747 = vpack.c.b16 %v713, %v711
          %v748 = vpack.c.b16 %v714, %v712
          %v749 = vpack.c.b16 %v717, %v715
          %v750 = vpack.c.b16 %v718, %v716
          %783 = vmatprep.subr.bf16.mxu0 %v720
          %784 = vmatpush1.bf16.msra.mxu0 %v719
          %785 = vmatprep.subr.bf16.mxu0 %v722
          %786 = vmatpush1.bf16.msra.mxu0 %v721
          %787 = vmatprep.subr.bf16.mxu0 %v724
          %788 = vmatpush1.bf16.msra.mxu0 %v723
          %789 = vmatprep.subr.bf16.mxu0 %v726
          %790 = vmatpush1.bf16.msra.mxu0 %v725
          %791 = vmatprep.subr.bf16.mxu0 %v728
          %792 = vmatpush1.bf16.msra.mxu0 %v727
          %793 = vmatprep.subr.bf16.mxu0 %v730
          %794 = vmatpush1.bf16.msra.mxu0 %v729
          %795 = vmatprep.subr.bf16.mxu0 %v732
          %796 = vmatpush1.bf16.msra.mxu0 %v731
          %797 = vmatprep.subr.bf16.mxu0 %v734
          %798 = vmatpush1.bf16.msra.mxu0 %v733
          %799 = vmatprep.subr.bf16.mxu0 %v736
          %800 = vmatpush1.bf16.msra.mxu0 %v735
          %801 = vmatprep.subr.bf16.mxu0 %v738
          %802 = vmatpush1.bf16.msra.mxu0 %v737
          %803 = vmatprep.subr.bf16.mxu0 %v740
          %804 = vmatpush1.bf16.msra.mxu0 %v739
          %805 = vmatprep.subr.bf16.mxu0 %v742
          %806 = vmatpush1.bf16.msra.mxu0 %v741
          %807 = vmatprep.subr.bf16.mxu0 %v744
          %808 = vmatpush1.bf16.msra.mxu0 %v743
          %809 = vmatprep.subr.bf16.mxu0 %v746
          %810 = vmatpush1.bf16.msra.mxu0 %v745
          %811 = vmatprep.subr.bf16.mxu0 %v748
          %812 = vmatpush1.bf16.msra.mxu0 %v747
          %813 = vmatprep.subr.bf16.mxu0 %v750
          %814 = vmatpush1.bf16.msra.mxu0 %v749
          %815 = vmatprep.mubr.bf16.mxu0 %v620
          %816 = vmatmul.mubr.bf16.gmra.mrb[0].mxu0 %v619
          %v817 = vpop.f32.mrb[0].mxu0
          %v818 = vadd.f32 0.0, %v817
          %v819 = vpop.f32.mrb[0].mxu0
          %v820 = vadd.f32 0.0, %v819
          %v821 = vpop.f32.mrb[0].mxu0
          %v822 = vpop.f32.mrb[0].mxu0
          %823 = vdwg.mxu0
          %v824 = vadd.f32 %v582, %v818
          %v825 = vadd.f32 %v583, %v820
          %826 = vst [vmem:[#allocation3] sm:$0xff] %v824
          %827 = vst [vmem:[#allocation3 + $0x8] sm:$0xff] %v825
        $region80: #{mult_vae_forward.1} parent=55 // pred_fallthru
          _
        %p828 = scmp.eq.s32.totalorder %s37, 1
        // Predicated region
        $region81: #{mult_vae_forward.1} parent=55 // pred_check
          %p829 = pneg %p828
        $region82: #{mult_vae_forward.1} parent=55 // pred_check_branch
          %831 = sbr.rel (%p829) target = $region84
        $region83: #{mult_vae_forward.1} parent=55 // pred_region
          %v832 = vld [vmem:[#allocation2] sm:$0xff]
          %v833 = vmax.f32 %v832, 1e-24
          %v834 = vrsqrt.pop %v833
          %v835 = vld [vmem:[#allocation3] sm:$0xff]
          %v836 = vld [vmem:[#allocation3 + $0x8] sm:$0xff]
          %838 = vset.pattern.permute.xlu0 0
          %839 = vperm.xlu0 %838, %v834
          %v840 = vpop.permute.xlu0 %839
          %v842 = vmul.f32 %v835, %v840
          %v843 = vmul.f32 %v836, %v840
          %v844 = vld [vmem:[%s2] sm:$0x3]
          %v846 = vlaneseq
          %v847 = vshrl.u32 %v846, 7
          %v848 = vsub.s32 0, %v847
          %v849 = vrot.slane %v844, %v848
          %v850 = vlaneseq
          %v851 = vshrl.u32 %v850, 7
          %v852 = vsub.s32 1, %v851
          %v853 = vrot.slane %v844, %v852
          %v856 = vadd.f32 %v842, %v849
          %v857 = vadd.f32 %v843, %v853
          %v858 = vtanh.pop %v856
          %v859 = vtanh.pop %v857
          %v860 = vpack.c.bf16 %v858, %v858
          %v861 = vpack.c.bf16 %v859, %v859
          %v862 = vld [vmem:[#allocation8] sm:$0xff]
          %v863 = vld [vmem:[#allocation8 + $0x8] sm:$0xff]
          %v864 = vld [vmem:[#allocation8 + $0x10] sm:$0xff]
          %v865 = vld [vmem:[#allocation8 + $0x18] sm:$0xff]
          %v866 = vld [vmem:[#allocation8 + $0x20] sm:$0xff]
          %v867 = vld [vmem:[#allocation8 + $0x28] sm:$0xff]
          %v868 = vld [vmem:[#allocation8 + $0x30] sm:$0xff]
          %v869 = vld [vmem:[#allocation8 + $0x38] sm:$0xff]
          %v870 = vld [vmem:[#allocation8 + $0x40] sm:$0xff]
          %v871 = vld [vmem:[#allocation8 + $0x48] sm:$0xff]
          %v872 = vld [vmem:[#allocation8 + $0x50] sm:$0xff]
          %v873 = vld [vmem:[#allocation8 + $0x58] sm:$0xff]
          %v874 = vld [vmem:[#allocation8 + $0x60] sm:$0xff]
          %v875 = vld [vmem:[#allocation8 + $0x68] sm:$0xff]
          %v876 = vld [vmem:[#allocation8 + $0x70] sm:$0xff]
          %v877 = vld [vmem:[#allocation8 + $0x78] sm:$0xff]
          %v878 = vld [vmem:[#allocation8 + $0x80] sm:$0xff]
          %v879 = vld [vmem:[#allocation8 + $0x88] sm:$0xff]
          %v880 = vld [vmem:[#allocation8 + $0x90] sm:$0xff]
          %v881 = vld [vmem:[#allocation8 + $0x98] sm:$0xff]
          %v882 = vld [vmem:[#allocation8 + $0xa0] sm:$0xff]
          %v883 = vld [vmem:[#allocation8 + $0xa8] sm:$0xff]
          %v884 = vld [vmem:[#allocation8 + $0xb0] sm:$0xff]
          %v885 = vld [vmem:[#allocation8 + $0xb8] sm:$0xff]
          %v886 = vld [vmem:[#allocation8 + $0xc0] sm:$0xff]
          %v887 = vld [vmem:[#allocation8 + $0xc8] sm:$0xff]
          %v888 = vld [vmem:[#allocation8 + $0xd0] sm:$0xff]
          %v889 = vld [vmem:[#allocation8 + $0xd8] sm:$0xff]
          %v890 = vld [vmem:[#allocation8 + $0xe0] sm:$0xff]
          %v891 = vld [vmem:[#allocation8 + $0xe8] sm:$0xff]
          %v892 = vld [vmem:[#allocation8 + $0xf0] sm:$0xff]
          %v893 = vld [vmem:[#allocation8 + $0xf8] sm:$0xff]
          %v894 = vld [vmem:[%s4] sm:$0x3]
          %v896 = vlaneseq
          %v897 = vshrl.u32 %v896, 7
          %v898 = vsub.s32 0, %v897
          %v899 = vrot.slane %v894, %v898
          %v900 = vlaneseq
          %v901 = vshrl.u32 %v900, 7
          %v902 = vsub.s32 1, %v901
          %v903 = vrot.slane %v894, %v902
          %v938 = vunpack.c.l.b16 %v862
          %v939 = vunpack.c.h.b16 %v862
          %v940 = vunpack.c.l.b16 %v863
          %v941 = vunpack.c.h.b16 %v863
          %v942 = vunpack.c.l.b16 %v864
          %v943 = vunpack.c.h.b16 %v864
          %v944 = vunpack.c.l.b16 %v865
          %v945 = vunpack.c.h.b16 %v865
          %v946 = vunpack.c.l.b16 %v866
          %v947 = vunpack.c.h.b16 %v866
          %v948 = vunpack.c.l.b16 %v867
          %v949 = vunpack.c.h.b16 %v867
          %v950 = vunpack.c.l.b16 %v868
          %v951 = vunpack.c.h.b16 %v868
          %v952 = vunpack.c.l.b16 %v869
          %v953 = vunpack.c.h.b16 %v869
          %v954 = vunpack.c.l.b16 %v870
          %v955 = vunpack.c.h.b16 %v870
          %v956 = vunpack.c.l.b16 %v871
          %v957 = vunpack.c.h.b16 %v871
          %v958 = vunpack.c.l.b16 %v872
          %v959 = vunpack.c.h.b16 %v872
          %v960 = vunpack.c.l.b16 %v873
          %v961 = vunpack.c.h.b16 %v873
          %v962 = vunpack.c.l.b16 %v874
          %v963 = vunpack.c.h.b16 %v874
          %v964 = vunpack.c.l.b16 %v875
          %v965 = vunpack.c.h.b16 %v875
          %v966 = vunpack.c.l.b16 %v876
          %v967 = vunpack.c.h.b16 %v876
          %v968 = vunpack.c.l.b16 %v877
          %v969 = vunpack.c.h.b16 %v877
          %v970 = vunpack.c.l.b16 %v878
          %v971 = vunpack.c.h.b16 %v878
          %v972 = vunpack.c.l.b16 %v879
          %v973 = vunpack.c.h.b16 %v879
          %v974 = vunpack.c.l.b16 %v880
          %v975 = vunpack.c.h.b16 %v880
          %v976 = vunpack.c.l.b16 %v881
          %v977 = vunpack.c.h.b16 %v881
          %v978 = vunpack.c.l.b16 %v882
          %v979 = vunpack.c.h.b16 %v882
          %v980 = vunpack.c.l.b16 %v883
          %v981 = vunpack.c.h.b16 %v883
          %v982 = vunpack.c.l.b16 %v884
          %v983 = vunpack.c.h.b16 %v884
          %v984 = vunpack.c.l.b16 %v885
          %v985 = vunpack.c.h.b16 %v885
          %v986 = vunpack.c.l.b16 %v886
          %v987 = vunpack.c.h.b16 %v886
          %v988 = vunpack.c.l.b16 %v887
          %v989 = vunpack.c.h.b16 %v887
          %v990 = vunpack.c.l.b16 %v888
          %v991 = vunpack.c.h.b16 %v888
          %v992 = vunpack.c.l.b16 %v889
          %v993 = vunpack.c.h.b16 %v889
          %v994 = vunpack.c.l.b16 %v890
          %v995 = vunpack.c.h.b16 %v890
          %v996 = vunpack.c.l.b16 %v891
          %v997 = vunpack.c.h.b16 %v891
          %v998 = vunpack.c.l.b16 %v892
          %v999 = vunpack.c.h.b16 %v892
          %v1000 = vunpack.c.l.b16 %v893
          %v1001 = vunpack.c.h.b16 %v893
          %v1002 = vpack.c.b16 %v940, %v938
          %v1003 = vpack.c.b16 %v941, %v939
          %v1004 = vpack.c.b16 %v944, %v942
          %v1005 = vpack.c.b16 %v945, %v943
          %v1006 = vpack.c.b16 %v948, %v946
          %v1007 = vpack.c.b16 %v949, %v947
          %v1008 = vpack.c.b16 %v952, %v950
          %v1009 = vpack.c.b16 %v953, %v951
          %v1010 = vpack.c.b16 %v956, %v954
          %v1011 = vpack.c.b16 %v957, %v955
          %v1012 = vpack.c.b16 %v960, %v958
          %v1013 = vpack.c.b16 %v961, %v959
          %v1014 = vpack.c.b16 %v964, %v962
          %v1015 = vpack.c.b16 %v965, %v963
          %v1016 = vpack.c.b16 %v968, %v966
          %v1017 = vpack.c.b16 %v969, %v967
          %v1018 = vpack.c.b16 %v972, %v970
          %v1019 = vpack.c.b16 %v973, %v971
          %v1020 = vpack.c.b16 %v976, %v974
          %v1021 = vpack.c.b16 %v977, %v975
          %v1022 = vpack.c.b16 %v980, %v978
          %v1023 = vpack.c.b16 %v981, %v979
          %v1024 = vpack.c.b16 %v984, %v982
          %v1025 = vpack.c.b16 %v985, %v983
          %v1026 = vpack.c.b16 %v988, %v986
          %v1027 = vpack.c.b16 %v989, %v987
          %v1028 = vpack.c.b16 %v992, %v990
          %v1029 = vpack.c.b16 %v993, %v991
          %v1030 = vpack.c.b16 %v996, %v994
          %v1031 = vpack.c.b16 %v997, %v995
          %v1032 = vpack.c.b16 %v1000, %v998
          %v1033 = vpack.c.b16 %v1001, %v999
          %1066 = vmatprep.subr.bf16.mxu0 %v1003
          %1067 = vmatpush1.bf16.msra.mxu0 %v1002
          %1068 = vmatprep.subr.bf16.mxu0 %v1005
          %1069 = vmatpush1.bf16.msra.mxu0 %v1004
          %1070 = vmatprep.subr.bf16.mxu0 %v1007
          %1071 = vmatpush1.bf16.msra.mxu0 %v1006
          %1072 = vmatprep.subr.bf16.mxu0 %v1009
          %1073 = vmatpush1.bf16.msra.mxu0 %v1008
          %1074 = vmatprep.subr.bf16.mxu0 %v1011
          %1075 = vmatpush1.bf16.msra.mxu0 %v1010
          %1076 = vmatprep.subr.bf16.mxu0 %v1013
          %1077 = vmatpush1.bf16.msra.mxu0 %v1012
          %1078 = vmatprep.subr.bf16.mxu0 %v1015
          %1079 = vmatpush1.bf16.msra.mxu0 %v1014
          %1080 = vmatprep.subr.bf16.mxu0 %v1017
          %1081 = vmatpush1.bf16.msra.mxu0 %v1016
          %1082 = vmatprep.subr.bf16.mxu0 %v1019
          %1083 = vmatpush1.bf16.msra.mxu0 %v1018
          %1084 = vmatprep.subr.bf16.mxu0 %v1021
          %1085 = vmatpush1.bf16.msra.mxu0 %v1020
          %1086 = vmatprep.subr.bf16.mxu0 %v1023
          %1087 = vmatpush1.bf16.msra.mxu0 %v1022
          %1088 = vmatprep.subr.bf16.mxu0 %v1025
          %1089 = vmatpush1.bf16.msra.mxu0 %v1024
          %1090 = vmatprep.subr.bf16.mxu0 %v1027
          %1091 = vmatpush1.bf16.msra.mxu0 %v1026
          %1092 = vmatprep.subr.bf16.mxu0 %v1029
          %1093 = vmatpush1.bf16.msra.mxu0 %v1028
          %1094 = vmatprep.subr.bf16.mxu0 %v1031
          %1095 = vmatpush1.bf16.msra.mxu0 %v1030
          %1096 = vmatprep.subr.bf16.mxu0 %v1033
          %1097 = vmatpush1.bf16.msra.mxu0 %v1032
          %1098 = vmatprep.mubr.bf16.mxu0 %v861
          %1099 = vmatmul.mubr.bf16.gmra.mrb[0].mxu0 %v860
          %v1100 = vpop.f32.mrb[0].mxu0
          %v1101 = vadd.f32 %v899, %v1100
          %v1102 = vpop.f32.mrb[0].mxu0
          %v1103 = vadd.f32 %v903, %v1102
          %v1104 = vpop.f32.mrb[0].mxu0
          %v1105 = vpop.f32.mrb[0].mxu0
          %1106 = vdwg.mxu0
          %1107 = vst [vmem:[%s556] sm:$0xff] %v1101
          %1108 = vst [vmem:[%s556 + $0x8] sm:$0xff] %v1103
          %v1109 = vpack.c.bf16 %v1101, %v1101
          %v1110 = vld [vmem:[#allocation10] sm:$0xff]
          %v1111 = vld [vmem:[#allocation10 + $0x8] sm:$0xff]
          %v1112 = vld [vmem:[#allocation10 + $0x10] sm:$0xff]
          %v1113 = vld [vmem:[#allocation10 + $0x18] sm:$0xff]
          %v1114 = vld [vmem:[#allocation10 + $0x20] sm:$0xff]
          %v1115 = vld [vmem:[#allocation10 + $0x28] sm:$0xff]
          %v1116 = vld [vmem:[#allocation10 + $0x30] sm:$0xff]
          %v1117 = vld [vmem:[#allocation10 + $0x38] sm:$0xff]
          %v1118 = vld [vmem:[#allocation10 + $0x40] sm:$0xff]
          %v1119 = vld [vmem:[#allocation10 + $0x48] sm:$0xff]
          %v1120 = vld [vmem:[#allocation10 + $0x50] sm:$0xff]
          %v1121 = vld [vmem:[#allocation10 + $0x58] sm:$0xff]
          %v1122 = vld [vmem:[#allocation10 + $0x60] sm:$0xff]
          %v1123 = vld [vmem:[#allocation10 + $0x68] sm:$0xff]
          %v1124 = vld [vmem:[#allocation10 + $0x70] sm:$0xff]
          %v1125 = vld [vmem:[#allocation10 + $0x78] sm:$0xff]
          %v1126 = vld [vmem:[%s6] sm:$0x3]
          %v1128 = vlaneseq
          %v1129 = vshrl.u32 %v1128, 7
          %v1130 = vsub.s32 0, %v1129
          %v1131 = vrot.slane %v1126, %v1130
          %v1132 = vlaneseq
          %v1133 = vshrl.u32 %v1132, 7
          %v1134 = vsub.s32 1, %v1133
          %v1135 = vrot.slane %v1126, %v1134
          %v1154 = vunpack.c.l.b16 %v1110
          %v1155 = vunpack.c.h.b16 %v1110
          %v1156 = vunpack.c.l.b16 %v1111
          %v1157 = vunpack.c.h.b16 %v1111
          %v1158 = vunpack.c.l.b16 %v1112
          %v1159 = vunpack.c.h.b16 %v1112
          %v1160 = vunpack.c.l.b16 %v1113
          %v1161 = vunpack.c.h.b16 %v1113
          %v1162 = vunpack.c.l.b16 %v1114
          %v1163 = vunpack.c.h.b16 %v1114
          %v1164 = vunpack.c.l.b16 %v1115
          %v1165 = vunpack.c.h.b16 %v1115
          %v1166 = vunpack.c.l.b16 %v1116
          %v1167 = vunpack.c.h.b16 %v1116
          %v1168 = vunpack.c.l.b16 %v1117
          %v1169 = vunpack.c.h.b16 %v1117
          %v1170 = vunpack.c.l.b16 %v1118
          %v1171 = vunpack.c.h.b16 %v1118
          %v1172 = vunpack.c.l.b16 %v1119
          %v1173 = vunpack.c.h.b16 %v1119
          %v1174 = vunpack.c.l.b16 %v1120
          %v1175 = vunpack.c.h.b16 %v1120
          %v1176 = vunpack.c.l.b16 %v1121
          %v1177 = vunpack.c.h.b16 %v1121
          %v1178 = vunpack.c.l.b16 %v1122
          %v1179 = vunpack.c.h.b16 %v1122
          %v1180 = vunpack.c.l.b16 %v1123
          %v1181 = vunpack.c.h.b16 %v1123
          %v1182 = vunpack.c.l.b16 %v1124
          %v1183 = vunpack.c.h.b16 %v1124
          %v1184 = vunpack.c.l.b16 %v1125
          %v1185 = vunpack.c.h.b16 %v1125
          %v1186 = vpack.c.b16 %v1156, %v1154
          %v1187 = vpack.c.b16 %v1157, %v1155
          %v1188 = vpack.c.b16 %v1160, %v1158
          %v1189 = vpack.c.b16 %v1161, %v1159
          %v1190 = vpack.c.b16 %v1164, %v1162
          %v1191 = vpack.c.b16 %v1165, %v1163
          %v1192 = vpack.c.b16 %v1168, %v1166
          %v1193 = vpack.c.b16 %v1169, %v1167
          %v1194 = vpack.c.b16 %v1172, %v1170
          %v1195 = vpack.c.b16 %v1173, %v1171
          %v1196 = vpack.c.b16 %v1176, %v1174
          %v1197 = vpack.c.b16 %v1177, %v1175
          %v1198 = vpack.c.b16 %v1180, %v1178
          %v1199 = vpack.c.b16 %v1181, %v1179
          %v1200 = vpack.c.b16 %v1184, %v1182
          %v1201 = vpack.c.b16 %v1185, %v1183
          %1218 = vmatprep.subr.bf16.mxu0 %v1187
          %1219 = vmatpush1.bf16.msra.mxu0 %v1186
          %1220 = vmatprep.subr.bf16.mxu0 %v1189
          %1221 = vmatpush1.bf16.msra.mxu0 %v1188
          %1222 = vmatprep.subr.bf16.mxu0 %v1191
          %1223 = vmatpush1.bf16.msra.mxu0 %v1190
          %1224 = vmatprep.subr.bf16.mxu0 %v1193
          %1225 = vmatpush1.bf16.msra.mxu0 %v1192
          %1226 = vmatprep.subr.bf16.mxu0 %v1195
          %1227 = vmatpush1.bf16.msra.mxu0 %v1194
          %1228 = vmatprep.subr.bf16.mxu0 %v1197
          %1229 = vmatpush1.bf16.msra.mxu0 %v1196
          %1230 = vmatprep.subr.bf16.mxu0 %v1199
          %1231 = vmatpush1.bf16.msra.mxu0 %v1198
          %1232 = vmatprep.subr.bf16.mxu0 %v1201
          %1233 = vmatpush1.bf16.msra.mxu0 %v1200
          %1234 = vmatprep.subr.bf16.mxu0 0
          %1235 = vmatpush1.bf16.msra.mxu0 0
          %1236 = vmatprep.subr.bf16.mxu0 0
          %1237 = vmatpush1.bf16.msra.mxu0 0
          %1238 = vmatprep.subr.bf16.mxu0 0
          %1239 = vmatpush1.bf16.msra.mxu0 0
          %1240 = vmatprep.subr.bf16.mxu0 0
          %1241 = vmatpush1.bf16.msra.mxu0 0
          %1242 = vmatprep.subr.bf16.mxu0 0
          %1243 = vmatpush1.bf16.msra.mxu0 0
          %1244 = vmatprep.subr.bf16.mxu0 0
          %1245 = vmatpush1.bf16.msra.mxu0 0
          %1246 = vmatprep.subr.bf16.mxu0 0
          %1247 = vmatpush1.bf16.msra.mxu0 0
          %1248 = vmatprep.subr.bf16.mxu0 0
          %1249 = vmatpush1.bf16.msra.mxu0 0
          %1250 = vmatprep.mubr.bf16.mxu0 0
          %1251 = vmatmul.mubr.bf16.gmra.mrb[0].mxu0 %v1109
          %v1252 = vpop.f32.mrb[0].mxu0
          %v1253 = vadd.f32 %v1131, %v1252
          %v1254 = vpop.f32.mrb[0].mxu0
          %v1255 = vadd.f32 %v1135, %v1254
          %v1256 = vpop.f32.mrb[0].mxu0
          %v1257 = vpop.f32.mrb[0].mxu0
          %1258 = vdwg.mxu0
          %v1259 = vtanh.pop %v1253
          %v1260 = vtanh.pop %v1255
          %v1261 = vpack.c.bf16 %v1259, %v1259
          %v1262 = vpack.c.bf16 %v1260, %v1260
          %v1265 = vunpack.c.l.b16 %v1261
          %v1266 = vunpack.c.l.b16 %v1262
          %v1267 = vpack.c.b16 %v1266, %v1265
          %1269 = vst [vmem:[#allocation4] sm:$0xff] %v1267
        $region84: #{mult_vae_forward.1} parent=55 // pred_fallthru
          _
        %p1270 = scmp.ge.s32.totalorder %s37, 2
        // Predicated region
        $region85: #{mult_vae_forward.1} parent=55 // pred_check
          %p1271 = pneg %p1270
        $region86: #{mult_vae_forward.1} parent=55 // pred_check_branch
          %1273 = sbr.rel (%p1271) target = $region88
        $region87: #{mult_vae_forward.1} parent=55 // pred_region
          %s1274 = ssub.s32 %s37, 2
          %s1275 = smul.u32 %s1274, 2
          %s1276 = scalar_lea.vmem %s8, %s1275
          %v1277 = vld [vmem:[%s1276] sm:$0x3]
          %v1278 = vld [vmem:[#allocation4] sm:$0xff]
          %v1279 = vld [vmem:[%s469] sm:$0xff]
          %v1280 = vld [vmem:[%s469 + $0x8] sm:$0xff]
          %v1281 = vld [vmem:[%s469 + $0x10] sm:$0xff]
          %v1282 = vld [vmem:[%s469 + $0x18] sm:$0xff]
          %v1283 = vld [vmem:[%s469 + $0x20] sm:$0xff]
          %v1284 = vld [vmem:[%s469 + $0x28] sm:$0xff]
          %v1285 = vld [vmem:[%s469 + $0x30] sm:$0xff]
          %v1286 = vld [vmem:[%s469 + $0x38] sm:$0xff]
          %v1287 = vld [vmem:[%s469 + $0x40] sm:$0xff]
          %v1288 = vld [vmem:[%s469 + $0x48] sm:$0xff]
          %v1289 = vld [vmem:[%s469 + $0x50] sm:$0xff]
          %v1290 = vld [vmem:[%s469 + $0x58] sm:$0xff]
          %v1291 = vld [vmem:[%s469 + $0x60] sm:$0xff]
          %v1292 = vld [vmem:[%s469 + $0x68] sm:$0xff]
          %v1293 = vld [vmem:[%s469 + $0x70] sm:$0xff]
          %v1294 = vld [vmem:[%s469 + $0x78] sm:$0xff]
          %v1295 = vld [vmem:[%s469 + $0x80] sm:$0xff]
          %v1296 = vld [vmem:[%s469 + $0x88] sm:$0xff]
          %v1297 = vld [vmem:[%s469 + $0x90] sm:$0xff]
          %v1298 = vld [vmem:[%s469 + $0x98] sm:$0xff]
          %v1299 = vld [vmem:[%s469 + $0xa0] sm:$0xff]
          %v1300 = vld [vmem:[%s469 + $0xa8] sm:$0xff]
          %v1301 = vld [vmem:[%s469 + $0xb0] sm:$0xff]
          %v1302 = vld [vmem:[%s469 + $0xb8] sm:$0xff]
          %v1303 = vld [vmem:[%s469 + $0xc0] sm:$0xff]
          %v1304 = vld [vmem:[%s469 + $0xc8] sm:$0xff]
          %v1305 = vld [vmem:[%s469 + $0xd0] sm:$0xff]
          %v1306 = vld [vmem:[%s469 + $0xd8] sm:$0xff]
          %v1307 = vld [vmem:[%s469 + $0xe0] sm:$0xff]
          %v1308 = vld [vmem:[%s469 + $0xe8] sm:$0xff]
          %v1309 = vld [vmem:[%s469 + $0xf0] sm:$0xff]
          %v1310 = vld [vmem:[%s469 + $0xf8] sm:$0xff]
          %v1312 = vlaneseq
          %v1313 = vshrl.u32 %v1312, 7
          %v1314 = vsub.s32 0, %v1313
          %v1315 = vrot.slane %v1277, %v1314
          %v1316 = vlaneseq
          %v1317 = vshrl.u32 %v1316, 7
          %v1318 = vsub.s32 1, %v1317
          %v1319 = vrot.slane %v1277, %v1318
          %v1323 = vunpack.c.l.b16 %v1278
          %v1324 = vunpack.c.h.b16 %v1278
          %v1325 = vpack.c.b16 %v1323, %v1323
          %v1326 = vpack.c.b16 %v1324, %v1324
          %v1361 = vunpack.c.l.b16 %v1279
          %v1362 = vunpack.c.h.b16 %v1279
          %v1363 = vunpack.c.l.b16 %v1280
          %v1364 = vunpack.c.h.b16 %v1280
          %v1365 = vunpack.c.l.b16 %v1281
          %v1366 = vunpack.c.h.b16 %v1281
          %v1367 = vunpack.c.l.b16 %v1282
          %v1368 = vunpack.c.h.b16 %v1282
          %v1369 = vunpack.c.l.b16 %v1283
          %v1370 = vunpack.c.h.b16 %v1283
          %v1371 = vunpack.c.l.b16 %v1284
          %v1372 = vunpack.c.h.b16 %v1284
          %v1373 = vunpack.c.l.b16 %v1285
          %v1374 = vunpack.c.h.b16 %v1285
          %v1375 = vunpack.c.l.b16 %v1286
          %v1376 = vunpack.c.h.b16 %v1286
          %v1377 = vunpack.c.l.b16 %v1287
          %v1378 = vunpack.c.h.b16 %v1287
          %v1379 = vunpack.c.l.b16 %v1288
          %v1380 = vunpack.c.h.b16 %v1288
          %v1381 = vunpack.c.l.b16 %v1289
          %v1382 = vunpack.c.h.b16 %v1289
          %v1383 = vunpack.c.l.b16 %v1290
          %v1384 = vunpack.c.h.b16 %v1290
          %v1385 = vunpack.c.l.b16 %v1291
          %v1386 = vunpack.c.h.b16 %v1291
          %v1387 = vunpack.c.l.b16 %v1292
          %v1388 = vunpack.c.h.b16 %v1292
          %v1389 = vunpack.c.l.b16 %v1293
          %v1390 = vunpack.c.h.b16 %v1293
          %v1391 = vunpack.c.l.b16 %v1294
          %v1392 = vunpack.c.h.b16 %v1294
          %v1393 = vunpack.c.l.b16 %v1295
          %v1394 = vunpack.c.h.b16 %v1295
          %v1395 = vunpack.c.l.b16 %v1296
          %v1396 = vunpack.c.h.b16 %v1296
          %v1397 = vunpack.c.l.b16 %v1297
          %v1398 = vunpack.c.h.b16 %v1297
          %v1399 = vunpack.c.l.b16 %v1298
          %v1400 = vunpack.c.h.b16 %v1298
          %v1401 = vunpack.c.l.b16 %v1299
          %v1402 = vunpack.c.h.b16 %v1299
          %v1403 = vunpack.c.l.b16 %v1300
          %v1404 = vunpack.c.h.b16 %v1300
          %v1405 = vunpack.c.l.b16 %v1301
          %v1406 = vunpack.c.h.b16 %v1301
          %v1407 = vunpack.c.l.b16 %v1302
          %v1408 = vunpack.c.h.b16 %v1302
          %v1409 = vunpack.c.l.b16 %v1303
          %v1410 = vunpack.c.h.b16 %v1303
          %v1411 = vunpack.c.l.b16 %v1304
          %v1412 = vunpack.c.h.b16 %v1304
          %v1413 = vunpack.c.l.b16 %v1305
          %v1414 = vunpack.c.h.b16 %v1305
          %v1415 = vunpack.c.l.b16 %v1306
          %v1416 = vunpack.c.h.b16 %v1306
          %v1417 = vunpack.c.l.b16 %v1307
          %v1418 = vunpack.c.h.b16 %v1307
          %v1419 = vunpack.c.l.b16 %v1308
          %v1420 = vunpack.c.h.b16 %v1308
          %v1421 = vunpack.c.l.b16 %v1309
          %v1422 = vunpack.c.h.b16 %v1309
          %v1423 = vunpack.c.l.b16 %v1310
          %v1424 = vunpack.c.h.b16 %v1310
          %v1425 = vpack.c.b16 %v1363, %v1361
          %v1426 = vpack.c.b16 %v1364, %v1362
          %v1427 = vpack.c.b16 %v1367, %v1365
          %v1428 = vpack.c.b16 %v1368, %v1366
          %v1429 = vpack.c.b16 %v1371, %v1369
          %v1430 = vpack.c.b16 %v1372, %v1370
          %v1431 = vpack.c.b16 %v1375, %v1373
          %v1432 = vpack.c.b16 %v1376, %v1374
          %v1433 = vpack.c.b16 %v1379, %v1377
          %v1434 = vpack.c.b16 %v1380, %v1378
          %v1435 = vpack.c.b16 %v1383, %v1381
          %v1436 = vpack.c.b16 %v1384, %v1382
          %v1437 = vpack.c.b16 %v1387, %v1385
          %v1438 = vpack.c.b16 %v1388, %v1386
          %v1439 = vpack.c.b16 %v1391, %v1389
          %v1440 = vpack.c.b16 %v1392, %v1390
          %v1441 = vpack.c.b16 %v1395, %v1393
          %v1442 = vpack.c.b16 %v1396, %v1394
          %v1443 = vpack.c.b16 %v1399, %v1397
          %v1444 = vpack.c.b16 %v1400, %v1398
          %v1445 = vpack.c.b16 %v1403, %v1401
          %v1446 = vpack.c.b16 %v1404, %v1402
          %v1447 = vpack.c.b16 %v1407, %v1405
          %v1448 = vpack.c.b16 %v1408, %v1406
          %v1449 = vpack.c.b16 %v1411, %v1409
          %v1450 = vpack.c.b16 %v1412, %v1410
          %v1451 = vpack.c.b16 %v1415, %v1413
          %v1452 = vpack.c.b16 %v1416, %v1414
          %v1453 = vpack.c.b16 %v1419, %v1417
          %v1454 = vpack.c.b16 %v1420, %v1418
          %v1455 = vpack.c.b16 %v1423, %v1421
          %v1456 = vpack.c.b16 %v1424, %v1422
          %1489 = vmatprep.subr.bf16.mxu0 %v1426
          %1490 = vmatpush1.bf16.msra.mxu0 %v1425
          %1491 = vmatprep.subr.bf16.mxu0 %v1428
          %1492 = vmatpush1.bf16.msra.mxu0 %v1427
          %1493 = vmatprep.subr.bf16.mxu0 %v1430
          %1494 = vmatpush1.bf16.msra.mxu0 %v1429
          %1495 = vmatprep.subr.bf16.mxu0 %v1432
          %1496 = vmatpush1.bf16.msra.mxu0 %v1431
          %1497 = vmatprep.subr.bf16.mxu0 %v1434
          %1498 = vmatpush1.bf16.msra.mxu0 %v1433
          %1499 = vmatprep.subr.bf16.mxu0 %v1436
          %1500 = vmatpush1.bf16.msra.mxu0 %v1435
          %1501 = vmatprep.subr.bf16.mxu0 %v1438
          %1502 = vmatpush1.bf16.msra.mxu0 %v1437
          %1503 = vmatprep.subr.bf16.mxu0 %v1440
          %1504 = vmatpush1.bf16.msra.mxu0 %v1439
          %1505 = vmatprep.subr.bf16.mxu0 %v1442
          %1506 = vmatpush1.bf16.msra.mxu0 %v1441
          %1507 = vmatprep.subr.bf16.mxu0 %v1444
          %1508 = vmatpush1.bf16.msra.mxu0 %v1443
          %1509 = vmatprep.subr.bf16.mxu0 %v1446
          %1510 = vmatpush1.bf16.msra.mxu0 %v1445
          %1511 = vmatprep.subr.bf16.mxu0 %v1448
          %1512 = vmatpush1.bf16.msra.mxu0 %v1447
          %1513 = vmatprep.subr.bf16.mxu0 %v1450
          %1514 = vmatpush1.bf16.msra.mxu0 %v1449
          %1515 = vmatprep.subr.bf16.mxu0 %v1452
          %1516 = vmatpush1.bf16.msra.mxu0 %v1451
          %1517 = vmatprep.subr.bf16.mxu0 %v1454
          %1518 = vmatpush1.bf16.msra.mxu0 %v1453
          %1519 = vmatprep.subr.bf16.mxu0 %v1456
          %1520 = vmatpush1.bf16.msra.mxu0 %v1455
          %1521 = vmatprep.mubr.bf16.mxu0 %v1326
          %1522 = vmatmul.mubr.bf16.gmra.mrb[0].mxu0 %v1325
          %v1523 = vpop.f32.mrb[0].mxu0
          %v1524 = vadd.f32 %v1315, %v1523
          %v1525 = vpop.f32.mrb[0].mxu0
          %v1526 = vadd.f32 %v1319, %v1525
          %v1527 = vpop.f32.mrb[0].mxu0
          %v1528 = vpop.f32.mrb[0].mxu0
          %1529 = vdwg.mxu0
          %1530 = vst [vmem:[%s519] sm:$0xff] %v1524
          %1531 = vst [vmem:[%s519 + $0x8] sm:$0xff] %v1526
        $region88: #{mult_vae_forward.1} parent=55 // pred_fallthru
          _
        %s1532 = sand.u32 %s280, 1
        %s1533 = scalar_lea.sflag [#allocation7], %s1532
        %s1534 = sand.u32 %s280, 1
        %s1535 = smul.addr %s1534, 16
        %s1536 = scalar_lea.vmem [#allocation13], %s1535
        %p1537 = scmp.lt.s32.totalorder %s36, 0
        %s1538 = scalar_select %p1537, %s36, 0
        %s1539 = smul.addr %s1538, 2
        %s1540 = smul.addr %s1539, 8
        %s1541 = scalar_lea.vmem %s10, %s1540
        // Predicated region
        $region89: #{mult_vae_forward.1} parent=55 // pred_check
          %p1542 = pneg %p290
        $region90: #{mult_vae_forward.1} parent=55 // pred_check_branch
          %1544 = sbr.rel (%p1542) target = $region92
        $region91: #{mult_vae_forward.1} parent=55 // pred_region
          %s1545 = ssub.s32 %s37, 2
          %p1546 = scmp.gt.s32.totalorder %s1545, 0
          %s1547 = scalar_select %p1546, %s1545, 0
          %s1548 = smul.u32 2, %s1547
          %s1550 = ssub.s32 256, 256
          %1551 = vsyncadd %s1533, %s1550
          %s1552 = smul.addr %s36, 4
          %s1553 = sadd.s32 %s1548, %s1552
          %s1554 = smul.addr %s1553, 128
          %s1555 = scalar_lea.hbm %s9, %s1554
          %s1557 = sshll.u32 %s1536, 4
          %s1558 = int_to_ptr.vmem [resolvable:$true] %s1557
          %1560 = dma.vmem_to_hbm [thread:$0]  %s1558, 256, %s1555, %s1533
        $region92: #{mult_vae_forward.1} parent=55 // pred_fallthru
          _
        // Predicated region
        $region93: #{mult_vae_forward.1} parent=55 // pred_check
          %p1561 = pneg %p316
        $region94: #{mult_vae_forward.1} parent=55 // pred_check_branch
          %1563 = sbr.rel (%p1561) target = $region96
        $region95: #{mult_vae_forward.1} parent=55 // pred_region
          _
        $region96: #{mult_vae_forward.1} parent=55 // pred_fallthru
          _
        // Predicated region
        $region97: #{mult_vae_forward.1} parent=55 // pred_check
          %p1564 = pneg %p316
        $region98: #{mult_vae_forward.1} parent=55 // pred_check_branch
          %1566 = sbr.rel (%p1564) target = $region100
        $region99: #{mult_vae_forward.1} parent=55 // pred_region
          %p1567 = scmp.lt.s32.totalorder %s36, 0
          %s1568 = scalar_select %p1567, %s36, 0
          %s1569 = smul.addr %s1568, 2
          %s1570 = smul.addr %s1569, 8
          %s1571 = scalar_lea.vmem %s10, %s1570
        $region100: #{mult_vae_forward.1} parent=55 // pred_fallthru
          _
      $region56: #{mult_vae_forward.1} parent=5 // pred_fallthru
        _
      %p1572 = scmp.le.s32.totalorder 2, %s27
      // Predicated region
      $region101: #{mult_vae_forward.1} parent=5 // pred_check
        %p1573 = pneg %p1572
      $region102: #{mult_vae_forward.1} parent=5 // pred_check_branch
        %1575 = sbr.rel (%p1573) target = $region104
      $region103: #{mult_vae_forward.1} parent=5 // pred_region
        %s1576 = ssub.s32 %s27, 2
        // Predicated region
        $region105: #{mult_vae_forward.1} parent=103 // pred_check
          %p1577 = pneg %p296
        $region106: #{mult_vae_forward.1} parent=103 // pred_check_branch
          %1579 = sbr.rel (%p1577) target = $region108
        $region107: #{mult_vae_forward.1} parent=103 // pred_region
          %s1580 = sand.u32 %s281, 1
          %s1581 = scalar_lea.sflag [#allocation7], %s1580
          %s1582 = sand.u32 %s281, 1
          %s1583 = smul.addr %s1582, 16
          %s1584 = scalar_lea.vmem [#allocation13], %s1583
          %1585 = dma.done %s1581, 256
        $region108: #{mult_vae_forward.1} parent=103 // pred_fallthru
          _
      $region104: #{mult_vae_forward.1} parent=5 // pred_fallthru
        _
    $region6: #{mult_vae_forward.1} parent=1 // loop_footer
      %s31 = sadd.s32 1, %s27
    $region7: #{mult_vae_forward.1} parent=1 // loop_footer_branch
      %26 = sbr.rel target = $region3
    $region8: #{mult_vae_forward.1} parent=1 // loop_exit
      _
    %1586 = vsyncpa [#allocation6], 1
    %s1587 = scalar_lea.sflag [#allocation6], 1
    %1588 = vsyncpa %s1587, 1
    %1589 = vsyncpa [#allocation9], 1
    %1590 = vsyncpa [#allocation12], 1
    %s1591 = scalar_lea.sflag [#allocation12], 1
    %1592 = vsyncpa %s1591, 1
    %1593 = vsyncpa [#allocation7], 1
    %s1594 = scalar_lea.sflag [#allocation7], 1
    %1595 = vsyncpa %s1594, 1

</llo_original>
